<compile_context>
chip_gen: v6e
topology: v6e:2x2x1
jax: 0.10.0
libtpu: 0.0.40
codegen_flags: <defaults>
</compile_context>

<pallas_src>
import math
import jax
import jax.numpy as jnp
from jax import lax
from jax.experimental import pallas as pl
from jax.experimental.pallas import tpu as pltpu

HIDDEN_DIM = 128
INPUT_DIM = 28
LAYER_DIM = 1
OUTPUT_DIM = 10
D_PAD = 32            # input feature dim padded 28 -> 32 (aligned loads)
FC_PAD = 128          # lane-dense padded width for the final Linear output


def _make_lstm_kernel(T, B, H):
    def kernel(x_ref, wx_ref, wh_ref, b_ref, wf_hbm, bf_hbm, out_ref,
               xw_sc, wf_sc, bf_sc, dma_sem):
        # --- Deferred DMA of the final-FC weights (hidden behind compute) ---
        cp_w = pltpu.make_async_copy(wf_hbm, wf_sc, dma_sem.at[0])
        cp_b = pltpu.make_async_copy(bf_hbm, bf_sc, dma_sem.at[1])
        cp_w.start()
        cp_b.start()

        # --- Prologue: input projection for ALL time steps in one matmul ---
        # x_ref: (T*B, D_PAD) bf16, time-major; rows [t*B, (t+1)*B) = step t.
        # Fused bias (bx+bh) added here once (f32).
        xw_sc[...] = (
            jnp.dot(x_ref[...], wx_ref[...],
                    preferred_element_type=jnp.float32)
            + b_ref[...])                                   # (T*B, 4H) f32

        # --- Recurrence: h/c carried in vregs, fully unrolled over T ---
        def step(t, carry):
            h, c = carry
            row = pl.multiple_of(t * B, B)                  # sublane-aligned
            xw_t = xw_sc[pl.ds(row, B), :]                  # (B, 4H) f32
            gates = xw_t + jnp.dot(h.astype(jnp.bfloat16), wh_ref[...],
                                   preferred_element_type=jnp.float32)
            ingate = jax.nn.sigmoid(gates[:, 0 * H:1 * H])
            forgetgate = jax.nn.sigmoid(gates[:, 1 * H:2 * H])
            cellgate = jnp.tanh(gates[:, 2 * H:3 * H])
            outgate = jax.nn.sigmoid(gates[:, 3 * H:4 * H])
            c_new = c * forgetgate + ingate * cellgate
            h_new = outgate * jnp.tanh(c_new)
            return h_new, c_new

        h0 = jnp.zeros((B, H), jnp.float32)
        c0 = jnp.zeros((B, H), jnp.float32)
        h, _ = lax.fori_loop(0, T, step, (h0, c0), unroll=True)

        # --- Final FC (lane-dense, padded to FC_PAD lanes) ---
        cp_w.wait()
        cp_b.wait()
        out_ref[...] = (
            jnp.dot(h.astype(jnp.bfloat16), wf_sc[...],
                    preferred_element_type=jnp.float32)
            + bf_sc[...]).astype(out_ref.dtype)

    return kernel


def prepare_params(params):
    """One-time kernel-ready parameter prep (hoisted out of the forward path):
    fuse the two LSTM biases, pad Wx's input dim 28->32, pad the FC output to
    128 lanes, and cast the matmul weights to bf16 (f32 accumulation stays in
    the kernel)."""
    wx, wh, bx, bh, wf, bf = params
    D, H4 = wx.shape
    H = wh.shape[0]
    O = wf.shape[1]
    wx_pad = (jnp.zeros((D_PAD, H4), jnp.float32).at[:D, :].set(wx)
              .astype(jnp.bfloat16))
    wh_bf = wh.astype(jnp.bfloat16)
    b_fused = (bx + bh).reshape(1, H4).astype(jnp.float32)
    wf_pad = (jnp.zeros((H, FC_PAD), jnp.float32).at[:, :O].set(wf)
              .astype(jnp.bfloat16))
    bf_pad = jnp.zeros((1, FC_PAD), jnp.float32).at[:, :O].set(bf)
    return wx_pad, wh_bf, b_fused, wf_pad, bf_pad


def lstm_model_forward(x, prepped):
    """x: (B, T, D_in) float32, prepped from prepare_params().
    Returns (B, OUTPUT_DIM) float32."""
    wx_pad, wh_bf, b_fused, wf_pad, bf_pad = prepped
    B, T, D = x.shape
    H = wh_bf.shape[0]

    # Time-major flatten + feature pad + bf16 cast. allow_input_fusion lets
    # XLA fuse this producer straight into the pallas_call operand DMA.
    x_tm = jnp.transpose(x, (1, 0, 2)).reshape(T * B, D)
    x_prep = jnp.pad(x_tm, ((0, 0), (0, D_PAD - D))).astype(jnp.bfloat16)

    vmem = pltpu.MemorySpace.VMEM
    in_specs = [
        pl.BlockSpec(memory_space=vmem),    # x (time-major, padded, bf16)
        pl.BlockSpec(memory_space=vmem),    # Wx (padded, bf16)
        pl.BlockSpec(memory_space=vmem),    # Wh (bf16)
        pl.BlockSpec(memory_space=vmem),    # fused bias (f32)
        pl.BlockSpec(memory_space=pl.ANY),  # Wfc: manual deferred DMA
        pl.BlockSpec(memory_space=pl.ANY),  # bfc: manual deferred DMA
    ]
    out_spec = pl.BlockSpec(memory_space=vmem)

    out = pl.pallas_call(
        _make_lstm_kernel(T, B, H),
        out_shape=jax.ShapeDtypeStruct((B, FC_PAD), jnp.float32),
        in_specs=in_specs,
        out_specs=out_spec,
        scratch_shapes=[
            pltpu.VMEM((T * B, 4 * H), jnp.float32),   # xW + bias stash
            pltpu.VMEM((H, FC_PAD), jnp.bfloat16),     # Wfc landing buffer
            pltpu.VMEM((1, FC_PAD), jnp.float32),      # bfc landing buffer
            pltpu.SemaphoreType.DMA((2,)),
        ],
        compiler_params=pltpu.CompilerParams(
            allow_input_fusion=[True, False, False, False, False, False]),
    )(x_prep, wx_pad, wh_bf, b_fused, wf_pad, bf_pad)

    return out[:, :OUTPUT_DIM]


def init_params(key, input_dim, hidden_dim, output_dim):
    """Deterministic init matching the PyTorch module's parameter shapes.
    LSTMCell params ~ U(-1/sqrt(H), 1/sqrt(H)); fc Linear initialized the same
    way for simplicity.  Linear weights are stored transposed
    (in_features, out_features) for the kernel's row-major matmul."""
    std = 1.0 / math.sqrt(hidden_dim)
    ks = jax.random.split(key, 6)
    wx = jax.random.uniform(ks[0], (input_dim, 4 * hidden_dim),
                            jnp.float32, -std, std)
    wh = jax.random.uniform(ks[1], (hidden_dim, 4 * hidden_dim),
                            jnp.float32, -std, std)
    bx = jax.random.uniform(ks[2], (1, 4 * hidden_dim), jnp.float32, -std, std)
    bh = jax.random.uniform(ks[3], (1, 4 * hidden_dim), jnp.float32, -std, std)
    wf = jax.random.uniform(ks[4], (hidden_dim, output_dim),
                            jnp.float32, -std, std)
    bf = jax.random.uniform(ks[5], (1, output_dim), jnp.float32, -std, std)
    return wx, wh, bx, bh, wf, bf


def reference_forward(x, params):
    """Pure-JAX f32 reference mirroring the PyTorch forward exactly."""
    wx, wh, bx, bh, wf, bf = params
    B, T, D = x.shape
    H = wh.shape[0]
    h = jnp.zeros((B, H), jnp.float32)
    c = jnp.zeros((B, H), jnp.float32)
    for t in range(T):
        gates = x[:, t, :] @ wx + h @ wh + bx + bh
        i = jax.nn.sigmoid(gates[:, 0 * H:1 * H])
        f = jax.nn.sigmoid(gates[:, 1 * H:2 * H])
        g = jnp.tanh(gates[:, 2 * H:3 * H])
        o = jax.nn.sigmoid(gates[:, 3 * H:4 * H])
        c = c * f + i * g
        h = o * jnp.tanh(c)
    return h @ wf + bf


def reference_forward_matched(x, params):
    """Pure-JAX reference matching the kernel's precision recipe (bf16 matmul
    operands, f32 accumulation, fused bias added in the prologue) -- used for
    a tight check that the kernel itself is correct."""
    wx, wh, bx, bh, wf, bf = params
    B, T, D = x.shape
    H = wh.shape[0]
    b = (bx + bh).astype(jnp.float32)
    wx_b = wx.astype(jnp.bfloat16)
    wh_b = wh.astype(jnp.bfloat16)
    wf_b = wf.astype(jnp.bfloat16)
    h = jnp.zeros((B, H), jnp.float32)
    c = jnp.zeros((B, H), jnp.float32)
    for t in range(T):
        xw = jnp.dot(x[:, t, :].astype(jnp.bfloat16), wx_b,
                     preferred_element_type=jnp.float32) + b
        gates = xw + jnp.dot(h.astype(jnp.bfloat16), wh_b,
                             preferred_element_type=jnp.float32)
        i = jax.nn.sigmoid(gates[:, 0 * H:1 * H])
        f = jax.nn.sigmoid(gates[:, 1 * H:2 * H])
        g = jnp.tanh(gates[:, 2 * H:3 * H])
        o = jax.nn.sigmoid(gates[:, 3 * H:4 * H])
        c = c * f + i * g
        h = o * jnp.tanh(c)
    return jnp.dot(h.astype(jnp.bfloat16), wf_b,
                   preferred_element_type=jnp.float32) + bf


if __name__ == "__main__":
    key = jax.random.PRNGKey(0)
    k_param, k_x = jax.random.split(key)

    B, T = 8, 8
    params = init_params(k_param, INPUT_DIM, HIDDEN_DIM, OUTPUT_DIM)
    prepped = prepare_params(params)       # weight prep done ONCE, not per call
    x = jax.random.normal(k_x, (B, T, INPUT_DIM), jnp.float32)

    forward = jax.jit(lstm_model_forward)
    out = jax.block_until_ready(forward(x, prepped))

    assert out.shape == (B, OUTPUT_DIM)
    # Tight check vs. a precision-matched (bf16-operand / f32-accum) reference.
    ref_matched = reference_forward_matched(x, params)
    assert jnp.allclose(out, ref_matched, atol=2e-3, rtol=2e-3)
    # Semantics check vs. the full-f32 PyTorch-equivalent reference (bf16
    # matmul operands introduce ~1e-3-level differences by design).
    ref_f32 = reference_forward(x, params)
    assert jnp.allclose(out, ref_f32, atol=5e-2, rtol=5e-2)

    print("KERNEL_OK")
</pallas_src>

<mosaic_0001>
module attributes {stable_mosaic.version = 11 : i64} {
  func.func @kernel(%arg0: memref<64x32xbf16, #tpu.memory_space<vmem>>, %arg1: memref<32x512xbf16, #tpu.memory_space<vmem>>, %arg2: memref<128x512xbf16, #tpu.memory_space<vmem>>, %arg3: memref<1x512xf32, #tpu.memory_space<vmem>>, %arg4: memref<128x128xbf16, #tpu.memory_space<any>>, %arg5: memref<1x128xf32, #tpu.memory_space<any>>, %arg6: memref<8x128xf32, #tpu.memory_space<vmem>>, %arg7: memref<64x512xf32, #tpu.memory_space<vmem>>, %arg8: memref<128x128xbf16, #tpu.memory_space<vmem>>, %arg9: memref<1x128xf32, #tpu.memory_space<vmem>>, %arg10: memref<2x!tpu.dma_semaphore, #tpu.memory_space<semaphore_mem>>) attributes {dimension_semantics = [], scalar_prefetch = 0 : i64, scratch_operands = 4 : i64, tpu.core_type = #tpu.core_type<tc>} {
    %c0_i32 = arith.constant 0 : i32
    %0 = tpu.memref_slice %arg10[%c0_i32] : memref<2x!tpu.dma_semaphore, #tpu.memory_space<semaphore_mem>> -> memref<1x!tpu.dma_semaphore, #tpu.memory_space<semaphore_mem>>
    %1 = tpu.memref_squeeze %0 : memref<1x!tpu.dma_semaphore, #tpu.memory_space<semaphore_mem>> -> memref<!tpu.dma_semaphore, #tpu.memory_space<semaphore_mem>>
    tpu.enqueue_dma source(%arg4 : memref<128x128xbf16, #tpu.memory_space<any>>) target(%arg8 : memref<128x128xbf16, #tpu.memory_space<vmem>>) target_semaphore(%1 : memref<!tpu.dma_semaphore, #tpu.memory_space<semaphore_mem>>)
    %c1_i32 = arith.constant 1 : i32
    %2 = tpu.memref_slice %arg10[%c1_i32] : memref<2x!tpu.dma_semaphore, #tpu.memory_space<semaphore_mem>> -> memref<1x!tpu.dma_semaphore, #tpu.memory_space<semaphore_mem>>
    %3 = tpu.memref_squeeze %2 : memref<1x!tpu.dma_semaphore, #tpu.memory_space<semaphore_mem>> -> memref<!tpu.dma_semaphore, #tpu.memory_space<semaphore_mem>>
    tpu.enqueue_dma source(%arg5 : memref<1x128xf32, #tpu.memory_space<any>>) target(%arg9 : memref<1x128xf32, #tpu.memory_space<vmem>>) target_semaphore(%3 : memref<!tpu.dma_semaphore, #tpu.memory_space<semaphore_mem>>)
    %c0 = arith.constant 0 : index
    %c0_0 = arith.constant 0 : index
    %4 = vector.load %arg0[%c0, %c0_0] : memref<64x32xbf16, #tpu.memory_space<vmem>>, vector<64x32xbf16>
    %c0_1 = arith.constant 0 : index
    %c0_2 = arith.constant 0 : index
    %5 = vector.load %arg1[%c0_1, %c0_2] : memref<32x512xbf16, #tpu.memory_space<vmem>>, vector<32x512xbf16>
    %cst = arith.constant dense<0.000000e+00> : vector<64x512xf32>
    %6 = tpu.matmul %4, %5, %cst {dimension_numbers = #tpu.dot_dimension_numbers<[1], [0], [0], [1], [0, 0, 1, 1], [], []>} : vector<64x32xbf16>, vector<32x512xbf16>, vector<64x512xf32> -> vector<64x512xf32>
    %c0_3 = arith.constant 0 : index
    %c0_4 = arith.constant 0 : index
    %7 = vector.load %arg3[%c0_3, %c0_4] : memref<1x512xf32, #tpu.memory_space<vmem>>, vector<1x512xf32>
    %8 = vector.broadcast %7 : vector<1x512xf32> to vector<64x512xf32>
    %9 = arith.addf %6, %8 : vector<64x512xf32>
    %c0_5 = arith.constant 0 : index
    %c0_6 = arith.constant 0 : index
    %10 = vector.load %arg7[%c0_5, %c0_6] : memref<64x512xf32, #tpu.memory_space<vmem>>, vector<64x512xf32>
    tpu.vector_store %arg7[%c0_5, %c0_6], %9 {strides = array<i32>} : memref<64x512xf32, #tpu.memory_space<vmem>>, vector<64x512xf32>,
    %cst_7 = arith.constant 0.000000e+00 : f32
    %11 = vector.broadcast %cst_7 : f32 to vector<8x128xf32>
    %cst_8 = arith.constant 0.000000e+00 : f32
    %12 = vector.broadcast %cst_8 : f32 to vector<8x128xf32>
    %c0_i32_9 = arith.constant 0 : i32
    %c8_i32 = arith.constant 8 : i32
    %13 = arith.muli %c0_i32_9, %c8_i32 : i32
    %14 = tpu.assume_multiple %13, 8 : i32
    %15 = arith.index_cast %14 : i32 to index
    %c0_10 = arith.constant 0 : index
    %16 = vector.load %arg7[%15, %c0_10] : memref<64x512xf32, #tpu.memory_space<vmem>>, vector<8x512xf32>
    %17 = arith.truncf %11 : vector<8x128xf32> to vector<8x128xbf16>
    %c0_11 = arith.constant 0 : index
    %c0_12 = arith.constant 0 : index
    %18 = vector.load %arg2[%c0_11, %c0_12] : memref<128x512xbf16, #tpu.memory_space<vmem>>, vector<128x512xbf16>
    %cst_13 = arith.constant dense<0.000000e+00> : vector<8x512xf32>
    %19 = tpu.matmul %17, %18, %cst_13 {dimension_numbers = #tpu.dot_dimension_numbers<[1], [0], [0], [1], [0, 0, 1, 1], [], []>} : vector<8x128xbf16>, vector<128x512xbf16>, vector<8x512xf32> -> vector<8x512xf32>
    %20 = arith.addf %16, %19 : vector<8x512xf32>
    %21 = vector.extract_strided_slice %20 {offsets = [0, 0], sizes = [8, 128], strides = [1, 1]} : vector<8x512xf32> to vector<8x128xf32>
    %22 = arith.negf %21 : vector<8x128xf32>
    %23 = math.exp %22 : vector<8x128xf32>
    %cst_14 = arith.constant 1.000000e+00 : f32
    %24 = vector.broadcast %cst_14 : f32 to vector<8x128xf32>
    %25 = arith.addf %24, %23 : vector<8x128xf32>
    %26 = arith.divf %24, %25 : vector<8x128xf32>
    %27 = vector.extract_strided_slice %20 {offsets = [0, 128], sizes = [8, 128], strides = [1, 1]} : vector<8x512xf32> to vector<8x128xf32>
    %28 = arith.negf %27 : vector<8x128xf32>
    %29 = math.exp %28 : vector<8x128xf32>
    %cst_15 = arith.constant 1.000000e+00 : f32
    %30 = vector.broadcast %cst_15 : f32 to vector<8x128xf32>
    %31 = arith.addf %30, %29 : vector<8x128xf32>
    %32 = arith.divf %30, %31 : vector<8x128xf32>
    %33 = vector.extract_strided_slice %20 {offsets = [0, 256], sizes = [8, 128], strides = [1, 1]} : vector<8x512xf32> to vector<8x128xf32>
    %34 = math.tanh %33 : vector<8x128xf32>
    %35 = vector.extract_strided_slice %20 {offsets = [0, 384], sizes = [8, 128], strides = [1, 1]} : vector<8x512xf32> to vector<8x128xf32>
    %36 = arith.negf %35 : vector<8x128xf32>
    %37 = math.exp %36 : vector<8x128xf32>
    %cst_16 = arith.constant 1.000000e+00 : f32
    %38 = vector.broadcast %cst_16 : f32 to vector<8x128xf32>
    %39 = arith.addf %38, %37 : vector<8x128xf32>
    %40 = arith.divf %38, %39 : vector<8x128xf32>
    %41 = arith.mulf %12, %32 : vector<8x128xf32>
    %42 = arith.mulf %26, %34 : vector<8x128xf32>
    %43 = arith.addf %41, %42 : vector<8x128xf32>
    %44 = math.tanh %43 : vector<8x128xf32>
    %45 = arith.mulf %40, %44 : vector<8x128xf32>
    %c1_i32_17 = arith.constant 1 : i32
    %c8_i32_18 = arith.constant 8 : i32
    %46 = arith.muli %c1_i32_17, %c8_i32_18 : i32
    %47 = tpu.assume_multiple %46, 8 : i32
    %48 = arith.index_cast %47 : i32 to index
    %c0_19 = arith.constant 0 : index
    %49 = vector.load %arg7[%48, %c0_19] : memref<64x512xf32, #tpu.memory_space<vmem>>, vector<8x512xf32>
    %50 = arith.truncf %45 : vector<8x128xf32> to vector<8x128xbf16>
    %c0_20 = arith.constant 0 : index
    %c0_21 = arith.constant 0 : index
    %51 = vector.load %arg2[%c0_20, %c0_21] : memref<128x512xbf16, #tpu.memory_space<vmem>>, vector<128x512xbf16>
    %cst_22 = arith.constant dense<0.000000e+00> : vector<8x512xf32>
    %52 = tpu.matmul %50, %51, %cst_22 {dimension_numbers = #tpu.dot_dimension_numbers<[1], [0], [0], [1], [0, 0, 1, 1], [], []>} : vector<8x128xbf16>, vector<128x512xbf16>, vector<8x512xf32> -> vector<8x512xf32>
    %53 = arith.addf %49, %52 : vector<8x512xf32>
    %54 = vector.extract_strided_slice %53 {offsets = [0, 0], sizes = [8, 128], strides = [1, 1]} : vector<8x512xf32> to vector<8x128xf32>
    %55 = arith.negf %54 : vector<8x128xf32>
    %56 = math.exp %55 : vector<8x128xf32>
    %cst_23 = arith.constant 1.000000e+00 : f32
    %57 = vector.broadcast %cst_23 : f32 to vector<8x128xf32>
    %58 = arith.addf %57, %56 : vector<8x128xf32>
    %59 = arith.divf %57, %58 : vector<8x128xf32>
    %60 = vector.extract_strided_slice %53 {offsets = [0, 128], sizes = [8, 128], strides = [1, 1]} : vector<8x512xf32> to vector<8x128xf32>
    %61 = arith.negf %60 : vector<8x128xf32>
    %62 = math.exp %61 : vector<8x128xf32>
    %cst_24 = arith.constant 1.000000e+00 : f32
    %63 = vector.broadcast %cst_24 : f32 to vector<8x128xf32>
    %64 = arith.addf %63, %62 : vector<8x128xf32>
    %65 = arith.divf %63, %64 : vector<8x128xf32>
    %66 = vector.extract_strided_slice %53 {offsets = [0, 256], sizes = [8, 128], strides = [1, 1]} : vector<8x512xf32> to vector<8x128xf32>
    %67 = math.tanh %66 : vector<8x128xf32>
    %68 = vector.extract_strided_slice %53 {offsets = [0, 384], sizes = [8, 128], strides = [1, 1]} : vector<8x512xf32> to vector<8x128xf32>
    %69 = arith.negf %68 : vector<8x128xf32>
    %70 = math.exp %69 : vector<8x128xf32>
    %cst_25 = arith.constant 1.000000e+00 : f32
    %71 = vector.broadcast %cst_25 : f32 to vector<8x128xf32>
    %72 = arith.addf %71, %70 : vector<8x128xf32>
    %73 = arith.divf %71, %72 : vector<8x128xf32>
    %74 = arith.mulf %43, %65 : vector<8x128xf32>
    %75 = arith.mulf %59, %67 : vector<8x128xf32>
    %76 = arith.addf %74, %75 : vector<8x128xf32>
    %77 = math.tanh %76 : vector<8x128xf32>
    %78 = arith.mulf %73, %77 : vector<8x128xf32>
    %c2_i32 = arith.constant 2 : i32
    %c8_i32_26 = arith.constant 8 : i32
    %79 = arith.muli %c2_i32, %c8_i32_26 : i32
    %80 = tpu.assume_multiple %79, 8 : i32
    %81 = arith.index_cast %80 : i32 to index
    %c0_27 = arith.constant 0 : index
    %82 = vector.load %arg7[%81, %c0_27] : memref<64x512xf32, #tpu.memory_space<vmem>>, vector<8x512xf32>
    %83 = arith.truncf %78 : vector<8x128xf32> to vector<8x128xbf16>
    %c0_28 = arith.constant 0 : index
    %c0_29 = arith.constant 0 : index
    %84 = vector.load %arg2[%c0_28, %c0_29] : memref<128x512xbf16, #tpu.memory_space<vmem>>, vector<128x512xbf16>
    %cst_30 = arith.constant dense<0.000000e+00> : vector<8x512xf32>
    %85 = tpu.matmul %83, %84, %cst_30 {dimension_numbers = #tpu.dot_dimension_numbers<[1], [0], [0], [1], [0, 0, 1, 1], [], []>} : vector<8x128xbf16>, vector<128x512xbf16>, vector<8x512xf32> -> vector<8x512xf32>
    %86 = arith.addf %82, %85 : vector<8x512xf32>
    %87 = vector.extract_strided_slice %86 {offsets = [0, 0], sizes = [8, 128], strides = [1, 1]} : vector<8x512xf32> to vector<8x128xf32>
    %88 = arith.negf %87 : vector<8x128xf32>
    %89 = math.exp %88 : vector<8x128xf32>
    %cst_31 = arith.constant 1.000000e+00 : f32
    %90 = vector.broadcast %cst_31 : f32 to vector<8x128xf32>
    %91 = arith.addf %90, %89 : vector<8x128xf32>
    %92 = arith.divf %90, %91 : vector<8x128xf32>
    %93 = vector.extract_strided_slice %86 {offsets = [0, 128], sizes = [8, 128], strides = [1, 1]} : vector<8x512xf32> to vector<8x128xf32>
    %94 = arith.negf %93 : vector<8x128xf32>
    %95 = math.exp %94 : vector<8x128xf32>
    %cst_32 = arith.constant 1.000000e+00 : f32
    %96 = vector.broadcast %cst_32 : f32 to vector<8x128xf32>
    %97 = arith.addf %96, %95 : vector<8x128xf32>
    %98 = arith.divf %96, %97 : vector<8x128xf32>
    %99 = vector.extract_strided_slice %86 {offsets = [0, 256], sizes = [8, 128], strides = [1, 1]} : vector<8x512xf32> to vector<8x128xf32>
    %100 = math.tanh %99 : vector<8x128xf32>
    %101 = vector.extract_strided_slice %86 {offsets = [0, 384], sizes = [8, 128], strides = [1, 1]} : vector<8x512xf32> to vector<8x128xf32>
    %102 = arith.negf %101 : vector<8x128xf32>
    %103 = math.exp %102 : vector<8x128xf32>
    %cst_33 = arith.constant 1.000000e+00 : f32
    %104 = vector.broadcast %cst_33 : f32 to vector<8x128xf32>
    %105 = arith.addf %104, %103 : vector<8x128xf32>
    %106 = arith.divf %104, %105 : vector<8x128xf32>
    %107 = arith.mulf %76, %98 : vector<8x128xf32>
    %108 = arith.mulf %92, %100 : vector<8x128xf32>
    %109 = arith.addf %107, %108 : vector<8x128xf32>
    %110 = math.tanh %109 : vector<8x128xf32>
    %111 = arith.mulf %106, %110 : vector<8x128xf32>
    %c3_i32 = arith.constant 3 : i32
    %c8_i32_34 = arith.constant 8 : i32
    %112 = arith.muli %c3_i32, %c8_i32_34 : i32
    %113 = tpu.assume_multiple %112, 8 : i32
    %114 = arith.index_cast %113 : i32 to index
    %c0_35 = arith.constant 0 : index
    %115 = vector.load %arg7[%114, %c0_35] : memref<64x512xf32, #tpu.memory_space<vmem>>, vector<8x512xf32>
    %116 = arith.truncf %111 : vector<8x128xf32> to vector<8x128xbf16>
    %c0_36 = arith.constant 0 : index
    %c0_37 = arith.constant 0 : index
    %117 = vector.load %arg2[%c0_36, %c0_37] : memref<128x512xbf16, #tpu.memory_space<vmem>>, vector<128x512xbf16>
    %cst_38 = arith.constant dense<0.000000e+00> : vector<8x512xf32>
    %118 = tpu.matmul %116, %117, %cst_38 {dimension_numbers = #tpu.dot_dimension_numbers<[1], [0], [0], [1], [0, 0, 1, 1], [], []>} : vector<8x128xbf16>, vector<128x512xbf16>, vector<8x512xf32> -> vector<8x512xf32>
    %119 = arith.addf %115, %118 : vector<8x512xf32>
    %120 = vector.extract_strided_slice %119 {offsets = [0, 0], sizes = [8, 128], strides = [1, 1]} : vector<8x512xf32> to vector<8x128xf32>
    %121 = arith.negf %120 : vector<8x128xf32>
    %122 = math.exp %121 : vector<8x128xf32>
    %cst_39 = arith.constant 1.000000e+00 : f32
    %123 = vector.broadcast %cst_39 : f32 to vector<8x128xf32>
    %124 = arith.addf %123, %122 : vector<8x128xf32>
    %125 = arith.divf %123, %124 : vector<8x128xf32>
    %126 = vector.extract_strided_slice %119 {offsets = [0, 128], sizes = [8, 128], strides = [1, 1]} : vector<8x512xf32> to vector<8x128xf32>
    %127 = arith.negf %126 : vector<8x128xf32>
    %128 = math.exp %127 : vector<8x128xf32>
    %cst_40 = arith.constant 1.000000e+00 : f32
    %129 = vector.broadcast %cst_40 : f32 to vector<8x128xf32>
    %130 = arith.addf %129, %128 : vector<8x128xf32>
    %131 = arith.divf %129, %130 : vector<8x128xf32>
    %132 = vector.extract_strided_slice %119 {offsets = [0, 256], sizes = [8, 128], strides = [1, 1]} : vector<8x512xf32> to vector<8x128xf32>
    %133 = math.tanh %132 : vector<8x128xf32>
    %134 = vector.extract_strided_slice %119 {offsets = [0, 384], sizes = [8, 128], strides = [1, 1]} : vector<8x512xf32> to vector<8x128xf32>
    %135 = arith.negf %134 : vector<8x128xf32>
    %136 = math.exp %135 : vector<8x128xf32>
    %cst_41 = arith.constant 1.000000e+00 : f32
    %137 = vector.broadcast %cst_41 : f32 to vector<8x128xf32>
    %138 = arith.addf %137, %136 : vector<8x128xf32>
    %139 = arith.divf %137, %138 : vector<8x128xf32>
    %140 = arith.mulf %109, %131 : vector<8x128xf32>
    %141 = arith.mulf %125, %133 : vector<8x128xf32>
    %142 = arith.addf %140, %141 : vector<8x128xf32>
    %143 = math.tanh %142 : vector<8x128xf32>
    %144 = arith.mulf %139, %143 : vector<8x128xf32>
    %c4_i32 = arith.constant 4 : i32
    %c8_i32_42 = arith.constant 8 : i32
    %145 = arith.muli %c4_i32, %c8_i32_42 : i32
    %146 = tpu.assume_multiple %145, 8 : i32
    %147 = arith.index_cast %146 : i32 to index
    %c0_43 = arith.constant 0 : index
    %148 = vector.load %arg7[%147, %c0_43] : memref<64x512xf32, #tpu.memory_space<vmem>>, vector<8x512xf32>
    %149 = arith.truncf %144 : vector<8x128xf32> to vector<8x128xbf16>
    %c0_44 = arith.constant 0 : index
    %c0_45 = arith.constant 0 : index
    %150 = vector.load %arg2[%c0_44, %c0_45] : memref<128x512xbf16, #tpu.memory_space<vmem>>, vector<128x512xbf16>
    %cst_46 = arith.constant dense<0.000000e+00> : vector<8x512xf32>
    %151 = tpu.matmul %149, %150, %cst_46 {dimension_numbers = #tpu.dot_dimension_numbers<[1], [0], [0], [1], [0, 0, 1, 1], [], []>} : vector<8x128xbf16>, vector<128x512xbf16>, vector<8x512xf32> -> vector<8x512xf32>
    %152 = arith.addf %148, %151 : vector<8x512xf32>
    %153 = vector.extract_strided_slice %152 {offsets = [0, 0], sizes = [8, 128], strides = [1, 1]} : vector<8x512xf32> to vector<8x128xf32>
    %154 = arith.negf %153 : vector<8x128xf32>
    %155 = math.exp %154 : vector<8x128xf32>
    %cst_47 = arith.constant 1.000000e+00 : f32
    %156 = vector.broadcast %cst_47 : f32 to vector<8x128xf32>
    %157 = arith.addf %156, %155 : vector<8x128xf32>
    %158 = arith.divf %156, %157 : vector<8x128xf32>
    %159 = vector.extract_strided_slice %152 {offsets = [0, 128], sizes = [8, 128], strides = [1, 1]} : vector<8x512xf32> to vector<8x128xf32>
    %160 = arith.negf %159 : vector<8x128xf32>
    %161 = math.exp %160 : vector<8x128xf32>
    %cst_48 = arith.constant 1.000000e+00 : f32
    %162 = vector.broadcast %cst_48 : f32 to vector<8x128xf32>
    %163 = arith.addf %162, %161 : vector<8x128xf32>
    %164 = arith.divf %162, %163 : vector<8x128xf32>
    %165 = vector.extract_strided_slice %152 {offsets = [0, 256], sizes = [8, 128], strides = [1, 1]} : vector<8x512xf32> to vector<8x128xf32>
    %166 = math.tanh %165 : vector<8x128xf32>
    %167 = vector.extract_strided_slice %152 {offsets = [0, 384], sizes = [8, 128], strides = [1, 1]} : vector<8x512xf32> to vector<8x128xf32>
    %168 = arith.negf %167 : vector<8x128xf32>
    %169 = math.exp %168 : vector<8x128xf32>
    %cst_49 = arith.constant 1.000000e+00 : f32
    %170 = vector.broadcast %cst_49 : f32 to vector<8x128xf32>
    %171 = arith.addf %170, %169 : vector<8x128xf32>
    %172 = arith.divf %170, %171 : vector<8x128xf32>
    %173 = arith.mulf %142, %164 : vector<8x128xf32>
    %174 = arith.mulf %158, %166 : vector<8x128xf32>
    %175 = arith.addf %173, %174 : vector<8x128xf32>
    %176 = math.tanh %175 : vector<8x128xf32>
    %177 = arith.mulf %172, %176 : vector<8x128xf32>
    %c5_i32 = arith.constant 5 : i32
    %c8_i32_50 = arith.constant 8 : i32
    %178 = arith.muli %c5_i32, %c8_i32_50 : i32
    %179 = tpu.assume_multiple %178, 8 : i32
    %180 = arith.index_cast %179 : i32 to index
    %c0_51 = arith.constant 0 : index
    %181 = vector.load %arg7[%180, %c0_51] : memref<64x512xf32, #tpu.memory_space<vmem>>, vector<8x512xf32>
    %182 = arith.truncf %177 : vector<8x128xf32> to vector<8x128xbf16>
    %c0_52 = arith.constant 0 : index
    %c0_53 = arith.constant 0 : index
    %183 = vector.load %arg2[%c0_52, %c0_53] : memref<128x512xbf16, #tpu.memory_space<vmem>>, vector<128x512xbf16>
    %cst_54 = arith.constant dense<0.000000e+00> : vector<8x512xf32>
    %184 = tpu.matmul %182, %183, %cst_54 {dimension_numbers = #tpu.dot_dimension_numbers<[1], [0], [0], [1], [0, 0, 1, 1], [], []>} : vector<8x128xbf16>, vector<128x512xbf16>, vector<8x512xf32> -> vector<8x512xf32>
    %185 = arith.addf %181, %184 : vector<8x512xf32>
    %186 = vector.extract_strided_slice %185 {offsets = [0, 0], sizes = [8, 128], strides = [1, 1]} : vector<8x512xf32> to vector<8x128xf32>
    %187 = arith.negf %186 : vector<8x128xf32>
    %188 = math.exp %187 : vector<8x128xf32>
    %cst_55 = arith.constant 1.000000e+00 : f32
    %189 = vector.broadcast %cst_55 : f32 to vector<8x128xf32>
    %190 = arith.addf %189, %188 : vector<8x128xf32>
    %191 = arith.divf %189, %190 : vector<8x128xf32>
    %192 = vector.extract_strided_slice %185 {offsets = [0, 128], sizes = [8, 128], strides = [1, 1]} : vector<8x512xf32> to vector<8x128xf32>
    %193 = arith.negf %192 : vector<8x128xf32>
    %194 = math.exp %193 : vector<8x128xf32>
    %cst_56 = arith.constant 1.000000e+00 : f32
    %195 = vector.broadcast %cst_56 : f32 to vector<8x128xf32>
    %196 = arith.addf %195, %194 : vector<8x128xf32>
    %197 = arith.divf %195, %196 : vector<8x128xf32>
    %198 = vector.extract_strided_slice %185 {offsets = [0, 256], sizes = [8, 128], strides = [1, 1]} : vector<8x512xf32> to vector<8x128xf32>
    %199 = math.tanh %198 : vector<8x128xf32>
    %200 = vector.extract_strided_slice %185 {offsets = [0, 384], sizes = [8, 128], strides = [1, 1]} : vector<8x512xf32> to vector<8x128xf32>
    %201 = arith.negf %200 : vector<8x128xf32>
    %202 = math.exp %201 : vector<8x128xf32>
    %cst_57 = arith.constant 1.000000e+00 : f32
    %203 = vector.broadcast %cst_57 : f32 to vector<8x128xf32>
    %204 = arith.addf %203, %202 : vector<8x128xf32>
    %205 = arith.divf %203, %204 : vector<8x128xf32>
    %206 = arith.mulf %175, %197 : vector<8x128xf32>
    %207 = arith.mulf %191, %199 : vector<8x128xf32>
    %208 = arith.addf %206, %207 : vector<8x128xf32>
    %209 = math.tanh %208 : vector<8x128xf32>
    %210 = arith.mulf %205, %209 : vector<8x128xf32>
    %c6_i32 = arith.constant 6 : i32
    %c8_i32_58 = arith.constant 8 : i32
    %211 = arith.muli %c6_i32, %c8_i32_58 : i32
    %212 = tpu.assume_multiple %211, 8 : i32
    %213 = arith.index_cast %212 : i32 to index
    %c0_59 = arith.constant 0 : index
    %214 = vector.load %arg7[%213, %c0_59] : memref<64x512xf32, #tpu.memory_space<vmem>>, vector<8x512xf32>
    %215 = arith.truncf %210 : vector<8x128xf32> to vector<8x128xbf16>
    %c0_60 = arith.constant 0 : index
    %c0_61 = arith.constant 0 : index
    %216 = vector.load %arg2[%c0_60, %c0_61] : memref<128x512xbf16, #tpu.memory_space<vmem>>, vector<128x512xbf16>
    %cst_62 = arith.constant dense<0.000000e+00> : vector<8x512xf32>
    %217 = tpu.matmul %215, %216, %cst_62 {dimension_numbers = #tpu.dot_dimension_numbers<[1], [0], [0], [1], [0, 0, 1, 1], [], []>} : vector<8x128xbf16>, vector<128x512xbf16>, vector<8x512xf32> -> vector<8x512xf32>
    %218 = arith.addf %214, %217 : vector<8x512xf32>
    %219 = vector.extract_strided_slice %218 {offsets = [0, 0], sizes = [8, 128], strides = [1, 1]} : vector<8x512xf32> to vector<8x128xf32>
    %220 = arith.negf %219 : vector<8x128xf32>
    %221 = math.exp %220 : vector<8x128xf32>
    %cst_63 = arith.constant 1.000000e+00 : f32
    %222 = vector.broadcast %cst_63 : f32 to vector<8x128xf32>
    %223 = arith.addf %222, %221 : vector<8x128xf32>
    %224 = arith.divf %222, %223 : vector<8x128xf32>
    %225 = vector.extract_strided_slice %218 {offsets = [0, 128], sizes = [8, 128], strides = [1, 1]} : vector<8x512xf32> to vector<8x128xf32>
    %226 = arith.negf %225 : vector<8x128xf32>
    %227 = math.exp %226 : vector<8x128xf32>
    %cst_64 = arith.constant 1.000000e+00 : f32
    %228 = vector.broadcast %cst_64 : f32 to vector<8x128xf32>
    %229 = arith.addf %228, %227 : vector<8x128xf32>
    %230 = arith.divf %228, %229 : vector<8x128xf32>
    %231 = vector.extract_strided_slice %218 {offsets = [0, 256], sizes = [8, 128], strides = [1, 1]} : vector<8x512xf32> to vector<8x128xf32>
    %232 = math.tanh %231 : vector<8x128xf32>
    %233 = vector.extract_strided_slice %218 {offsets = [0, 384], sizes = [8, 128], strides = [1, 1]} : vector<8x512xf32> to vector<8x128xf32>
    %234 = arith.negf %233 : vector<8x128xf32>
    %235 = math.exp %234 : vector<8x128xf32>
    %cst_65 = arith.constant 1.000000e+00 : f32
    %236 = vector.broadcast %cst_65 : f32 to vector<8x128xf32>
    %237 = arith.addf %236, %235 : vector<8x128xf32>
    %238 = arith.divf %236, %237 : vector<8x128xf32>
    %239 = arith.mulf %208, %230 : vector<8x128xf32>
    %240 = arith.mulf %224, %232 : vector<8x128xf32>
    %241 = arith.addf %239, %240 : vector<8x128xf32>
    %242 = math.tanh %241 : vector<8x128xf32>
    %243 = arith.mulf %238, %242 : vector<8x128xf32>
    %c7_i32 = arith.constant 7 : i32
    %c8_i32_66 = arith.constant 8 : i32
    %244 = arith.muli %c7_i32, %c8_i32_66 : i32
    %245 = tpu.assume_multiple %244, 8 : i32
    %246 = arith.index_cast %245 : i32 to index
    %c0_67 = arith.constant 0 : index
    %247 = vector.load %arg7[%246, %c0_67] : memref<64x512xf32, #tpu.memory_space<vmem>>, vector<8x512xf32>
    %248 = arith.truncf %243 : vector<8x128xf32> to vector<8x128xbf16>
    %c0_68 = arith.constant 0 : index
    %c0_69 = arith.constant 0 : index
    %249 = vector.load %arg2[%c0_68, %c0_69] : memref<128x512xbf16, #tpu.memory_space<vmem>>, vector<128x512xbf16>
    %cst_70 = arith.constant dense<0.000000e+00> : vector<8x512xf32>
    %250 = tpu.matmul %248, %249, %cst_70 {dimension_numbers = #tpu.dot_dimension_numbers<[1], [0], [0], [1], [0, 0, 1, 1], [], []>} : vector<8x128xbf16>, vector<128x512xbf16>, vector<8x512xf32> -> vector<8x512xf32>
    %251 = arith.addf %247, %250 : vector<8x512xf32>
    %252 = vector.extract_strided_slice %251 {offsets = [0, 0], sizes = [8, 128], strides = [1, 1]} : vector<8x512xf32> to vector<8x128xf32>
    %253 = arith.negf %252 : vector<8x128xf32>
    %254 = math.exp %253 : vector<8x128xf32>
    %cst_71 = arith.constant 1.000000e+00 : f32
    %255 = vector.broadcast %cst_71 : f32 to vector<8x128xf32>
    %256 = arith.addf %255, %254 : vector<8x128xf32>
    %257 = arith.divf %255, %256 : vector<8x128xf32>
    %258 = vector.extract_strided_slice %251 {offsets = [0, 128], sizes = [8, 128], strides = [1, 1]} : vector<8x512xf32> to vector<8x128xf32>
    %259 = arith.negf %258 : vector<8x128xf32>
    %260 = math.exp %259 : vector<8x128xf32>
    %cst_72 = arith.constant 1.000000e+00 : f32
    %261 = vector.broadcast %cst_72 : f32 to vector<8x128xf32>
    %262 = arith.addf %261, %260 : vector<8x128xf32>
    %263 = arith.divf %261, %262 : vector<8x128xf32>
    %264 = vector.extract_strided_slice %251 {offsets = [0, 256], sizes = [8, 128], strides = [1, 1]} : vector<8x512xf32> to vector<8x128xf32>
    %265 = math.tanh %264 : vector<8x128xf32>
    %266 = vector.extract_strided_slice %251 {offsets = [0, 384], sizes = [8, 128], strides = [1, 1]} : vector<8x512xf32> to vector<8x128xf32>
    %267 = arith.negf %266 : vector<8x128xf32>
    %268 = math.exp %267 : vector<8x128xf32>
    %cst_73 = arith.constant 1.000000e+00 : f32
    %269 = vector.broadcast %cst_73 : f32 to vector<8x128xf32>
    %270 = arith.addf %269, %268 : vector<8x128xf32>
    %271 = arith.divf %269, %270 : vector<8x128xf32>
    %272 = arith.mulf %241, %263 : vector<8x128xf32>
    %273 = arith.mulf %257, %265 : vector<8x128xf32>
    %274 = arith.addf %272, %273 : vector<8x128xf32>
    %275 = math.tanh %274 : vector<8x128xf32>
    %276 = arith.mulf %271, %275 : vector<8x128xf32>
    %c8_i32_74 = arith.constant 8 : i32
    %c0_i32_75 = arith.constant 0 : i32
    %277 = tpu.memref_slice %arg10[%c0_i32_75] : memref<2x!tpu.dma_semaphore, #tpu.memory_space<semaphore_mem>> -> memref<1x!tpu.dma_semaphore, #tpu.memory_space<semaphore_mem>>
    %278 = tpu.memref_squeeze %277 : memref<1x!tpu.dma_semaphore, #tpu.memory_space<semaphore_mem>> -> memref<!tpu.dma_semaphore, #tpu.memory_space<semaphore_mem>>
    tpu.wait_dma2 semaphore(%278 : memref<!tpu.dma_semaphore, #tpu.memory_space<semaphore_mem>>) src(%arg4 : memref<128x128xbf16, #tpu.memory_space<any>>) dst(%arg8 : memref<128x128xbf16, #tpu.memory_space<vmem>>)
    %c1_i32_76 = arith.constant 1 : i32
    %279 = tpu.memref_slice %arg10[%c1_i32_76] : memref<2x!tpu.dma_semaphore, #tpu.memory_space<semaphore_mem>> -> memref<1x!tpu.dma_semaphore, #tpu.memory_space<semaphore_mem>>
    %280 = tpu.memref_squeeze %279 : memref<1x!tpu.dma_semaphore, #tpu.memory_space<semaphore_mem>> -> memref<!tpu.dma_semaphore, #tpu.memory_space<semaphore_mem>>
    tpu.wait_dma2 semaphore(%280 : memref<!tpu.dma_semaphore, #tpu.memory_space<semaphore_mem>>) src(%arg5 : memref<1x128xf32, #tpu.memory_space<any>>) dst(%arg9 : memref<1x128xf32, #tpu.memory_space<vmem>>)
    %281 = arith.truncf %276 : vector<8x128xf32> to vector<8x128xbf16>
    %c0_77 = arith.constant 0 : index
    %c0_78 = arith.constant 0 : index
    %282 = vector.load %arg8[%c0_77, %c0_78] : memref<128x128xbf16, #tpu.memory_space<vmem>>, vector<128x128xbf16>
    %cst_79 = arith.constant dense<0.000000e+00> : vector<8x128xf32>
    %283 = tpu.matmul %281, %282, %cst_79 {dimension_numbers = #tpu.dot_dimension_numbers<[1], [0], [0], [1], [0, 0, 1, 1], [], []>} : vector<8x128xbf16>, vector<128x128xbf16>, vector<8x128xf32> -> vector<8x128xf32>
    %c0_80 = arith.constant 0 : index
    %c0_81 = arith.constant 0 : index
    %284 = vector.load %arg9[%c0_80, %c0_81] : memref<1x128xf32, #tpu.memory_space<vmem>>, vector<1x128xf32>
    %285 = vector.broadcast %284 : vector<1x128xf32> to vector<8x128xf32>
    %286 = arith.addf %283, %285 : vector<8x128xf32>
    %c0_82 = arith.constant 0 : index
    %c0_83 = arith.constant 0 : index
    %287 = vector.load %arg6[%c0_82, %c0_83] : memref<8x128xf32, #tpu.memory_space<vmem>>, vector<8x128xf32>
    tpu.vector_store %arg6[%c0_82, %c0_83], %286 {strides = array<i32>} : memref<8x128xf32, #tpu.memory_space<vmem>>, vector<8x128xf32>,
    return
  }
}

</mosaic_0001>

<llo_original>
// kernel: lstm_model_forward.2
$region0: #{lstm_model_forward.2}
  #allocation0 [shape = 'u32[]', space=smem, size = 0x4, offset = 0x4, fixed_abs, tag = 'smem constant byte address 0x4 - core index']
  #allocation1 [shape = 'u32[144,128]{1,0:T(1,128)}', space=vmem, size = 0x12000, scoped, tag = 'internal scratch']
  #allocation2 [shape = 'f32[64,512]{1,0:T(8,128)}', space=vmem, size = 0x20000, scoped, tag = 'scratch operand']
  #allocation3 [shape = 'bf16[128,128]{1,0:T(8,128)(2,1)}', space=vmem, size = 0x8000, scoped, tag = 'scratch operand']
  #allocation4 [shape = 'f32[1,128]{1,0:T(1,128)}', space=vmem, size = 0x200, scoped, tag = 'scratch operand']
  #allocation5 [shape = 's32[2]{0}', space=sflag, size = 0x8, scoped, tag = 'scratch operand']
  #allocation6 [shape = 'u32[2048]{0}', space=vmem, size = 0x2000, scoped, tag = 'scoped memory for lstm_model_forward.2']
  #allocation7 [shape = 'u32[2048]{0}', space=vmem, size = 0x2000, scoped, tag = 'scoped memory for lstm_model_forward.2']
  #allocation8 [shape = 'u32[2048]{0}', space=vmem, size = 0x2000, scoped, tag = 'scoped memory for lstm_model_forward.2']
  #allocation9 [shape = 'u32[2048]{0}', space=vmem, size = 0x2000, scoped, tag = 'scoped memory for lstm_model_forward.2']
  #allocation10 [shape = 'u32[2048]{0}', space=vmem, size = 0x2000, scoped, tag = 'scoped memory for lstm_model_forward.2']
  #allocation16 [shape = 's32[]', space=sflag, size = 0x4, offset = 0, fixed_abs, tag = 'sflag constant byte address 0x0 - dummy sync flag']
  #allocation17 [shape = 's32[]', space=sflag, size = 0x4, offset = 0, fixed_abs, tag = 'sflag constant byte address 0x0 - dummy sync flag']
  %s0 = inlined_call_operand.vmem [shape: bf16[32,512], index: 0, kind: input, shape index: {}]
  %s1 = inlined_call_operand.hbm [shape: bf16[128,512], index: 1, kind: input, shape index: {}]
  %s2 = inlined_call_operand.vmem [shape: f32[1,512], index: 2, kind: input, shape index: {}]
  %s3 = inlined_call_operand.vmem [shape: bf16[128,128], index: 3, kind: input, shape index: {}]
  %s4 = inlined_call_operand.vmem [shape: f32[1,128], index: 4, kind: input, shape index: {}]
  %s5 = inlined_call_operand.vmem [shape: bf16[64,28], index: 5, kind: input, shape index: {}]
  %s6 = inlined_call_operand.<no memory space> [shape: bf16[], index: 6, kind: input, shape index: {}]
  %s7 = inlined_call_operand.hbm [shape: f32[8,128], index: 7, kind: output, shape index: {}]
  %s8 = sld [smem:[#allocation0]]
  $region94: #{lstm_model_forward.2} parent=0
    _
  %s10 = ssub.s32 1, %s8
  %s11 = scalar_select 0, %s10, %s8
  %v12 = vstv %s6
  %v13 = vunpack.i.l.bf16 %v12
  %v15 = vunpack.i.h.bf16 %v12
  $region1: #{lstm_model_forward.2} parent=0
    #allocation11 [shape = 'u8[131072]{0}', space=vmem, size = 0x20000, scoped, tag = 'input window, operand 2, single buffered']
    #allocation12 [shape = 's32[1]{0}', space=sflag, size = 0x4, scoped, tag = 'scoped memory for lstm_model_forward.2']
    #allocation13 [shape = 's32[1]{0}', space=sflag, size = 0x4, scoped, tag = 'scoped memory for lstm_model_forward.2']
    #allocation14 [shape = 'u8[4096]{0}', space=vmem, size = 0x1000, scoped, tag = 'output window, operand 0, single buffered']
    #allocation15 [shape = 'u8[16384]{0}', space=vmem, size = 0x4000, dematerialized = true, scoped, tag = 'FusionAdapter Buffer %fusion.1 = bf16[64,32]{1,0:T(8,128)(2,1)} fusion(%param_5.1, %param_6), kind=kLoop, calls=%fused_computation.3.clone, metadata={op_name="jit(lstm_model_forward)/jit(_pad)/pad" stack_frame_id=8}']
    %17 = vsyncpa [#allocation12], 0
    %18 = vsyncpa [#allocation13], 0
    // Predicated region
    $region2: #{lstm_model_forward.2} parent=1 // pred_check
      _
    $region3: #{lstm_model_forward.2} parent=1 // pred_check_branch
      %20 = sbr.rel (0) target = $region5
    $region4: #{lstm_model_forward.2} parent=1 // pred_region
      _
    $region5: #{lstm_model_forward.2} parent=1 // pred_fallthru
      _
    // Predicated region
    $region6: #{lstm_model_forward.2} parent=1 // pred_check
      _
    $region7: #{lstm_model_forward.2} parent=1 // pred_check_branch
      %22 = sbr.rel (0) target = $region9
    $region8: #{lstm_model_forward.2} parent=1 // pred_region
      _
    $region9: #{lstm_model_forward.2} parent=1 // pred_fallthru
      _
    // Predicated region
    $region10: #{lstm_model_forward.2} parent=1 // pred_check
      _
    $region11: #{lstm_model_forward.2} parent=1 // pred_check_branch
      %24 = sbr.rel (0) target = $region13
    $region12: #{lstm_model_forward.2} parent=1 // pred_region
      %s26 = ssub.s32 4096, 4096
      %27 = vsyncadd [#allocation12], %s26
      %s28 = sshll.u32 [#allocation11], 4
      %s29 = int_to_ptr.vmem [resolvable:$true] %s28
      %34 = dma.hbm_to_vmem [thread:$0]  %s1, 4096, %s29, [#allocation12], 256, 256, 16
    $region13: #{lstm_model_forward.2} parent=1 // pred_fallthru
      _
    // Predicated region
    $region14: #{lstm_model_forward.2} parent=1 // pred_check
      _
    $region15: #{lstm_model_forward.2} parent=1 // pred_check_branch
      %36 = sbr.rel (0) target = $region17
    $region16: #{lstm_model_forward.2} parent=1 // pred_region
      _
    $region17: #{lstm_model_forward.2} parent=1 // pred_fallthru
      _
    // Predicated region
    $region18: #{lstm_model_forward.2} parent=1 // pred_check
      _
    $region19: #{lstm_model_forward.2} parent=1 // pred_check_branch
      %38 = sbr.rel (0) target = $region21
    $region20: #{lstm_model_forward.2} parent=1 // pred_region
      %39 = dma.done [#allocation12], 4096
    $region21: #{lstm_model_forward.2} parent=1 // pred_fallthru
      _
    %s41 = sor.u32 255, 127
    %s42 = sand.u32 %s41, 85
    %s43 = sshrl.u32 %s42, 1
    %s44 = sor.u32 %s42, %s43
    %s45 = sand.u32 51, %s44
    %s46 = sshrl.u32 %s45, 2
    %s47 = sor.u32 %s45, %s46
    %s48 = sand.u32 15, %s47
    %v49 = vld [vmem:[%s5] sm:%s48]
    %v50 = vunpack.c.l.bf16 %v49
    %v51 = vunpack.c.h.bf16 %v49
    %v52 = vlaneseq
    %v53 = vand.u32 %v52, 127
    %vm55 = vcmp.lt.s32.totalorder %v53, 28
    %v56 = vsel %vm55, %v50, %v13
    %v57 = vpack.c.bf16 0.0, %v56
    %s59 = ssub.s32 16, 1
    %60 = vst [vmem:[#allocation15] sm:%s59] %v57
    %s61 = scalar_lea.vmem %s5, 4
    %s63 = sor.u32 255, 127
    %s64 = sand.u32 %s63, 85
    %s65 = sshrl.u32 %s64, 1
    %s66 = sor.u32 %s64, %s65
    %s67 = sand.u32 51, %s66
    %s68 = sshrl.u32 %s67, 2
    %s69 = sor.u32 %s67, %s68
    %s70 = sand.u32 15, %s69
    %v71 = vld [vmem:[%s61] sm:%s70]
    %v72 = vunpack.c.l.bf16 %v71
    %v73 = vunpack.c.h.bf16 %v71
    %v74 = vlaneseq
    %v75 = vand.u32 %v74, 127
    %vm77 = vcmp.lt.s32.totalorder %v75, 28
    %v78 = vsel %vm77, %v72, %v13
    %s79 = scalar_lea.vmem [#allocation15], 4
    %v80 = vpack.c.bf16 0.0, %v78
    %s82 = ssub.s32 16, 1
    %83 = vst [vmem:[%s79] sm:%s82] %v80
    %s84 = scalar_lea.vmem %s5, 8
    %s86 = sor.u32 255, 127
    %s87 = sand.u32 %s86, 85
    %s88 = sshrl.u32 %s87, 1
    %s89 = sor.u32 %s87, %s88
    %s90 = sand.u32 51, %s89
    %s91 = sshrl.u32 %s90, 2
    %s92 = sor.u32 %s90, %s91
    %s93 = sand.u32 15, %s92
    %v94 = vld [vmem:[%s84] sm:%s93]
    %v95 = vunpack.c.l.bf16 %v94
    %v96 = vunpack.c.h.bf16 %v94
    %v97 = vlaneseq
    %v98 = vand.u32 %v97, 127
    %vm100 = vcmp.lt.s32.totalorder %v98, 28
    %v101 = vsel %vm100, %v95, %v13
    %s102 = scalar_lea.vmem [#allocation15], 8
    %v103 = vpack.c.bf16 0.0, %v101
    %s105 = ssub.s32 16, 1
    %106 = vst [vmem:[%s102] sm:%s105] %v103
    %s107 = scalar_lea.vmem %s5, 12
    %s109 = sor.u32 255, 127
    %s110 = sand.u32 %s109, 85
    %s111 = sshrl.u32 %s110, 1
    %s112 = sor.u32 %s110, %s111
    %s113 = sand.u32 51, %s112
    %s114 = sshrl.u32 %s113, 2
    %s115 = sor.u32 %s113, %s114
    %s116 = sand.u32 15, %s115
    %v117 = vld [vmem:[%s107] sm:%s116]
    %v118 = vunpack.c.l.bf16 %v117
    %v119 = vunpack.c.h.bf16 %v117
    %v120 = vlaneseq
    %v121 = vand.u32 %v120, 127
    %vm123 = vcmp.lt.s32.totalorder %v121, 28
    %v124 = vsel %vm123, %v118, %v13
    %s125 = scalar_lea.vmem [#allocation15], 12
    %v126 = vpack.c.bf16 0.0, %v124
    %s128 = ssub.s32 16, 1
    %129 = vst [vmem:[%s125] sm:%s128] %v126
    %s130 = scalar_lea.vmem %s5, 16
    %s132 = sor.u32 255, 127
    %s133 = sand.u32 %s132, 85
    %s134 = sshrl.u32 %s133, 1
    %s135 = sor.u32 %s133, %s134
    %s136 = sand.u32 51, %s135
    %s137 = sshrl.u32 %s136, 2
    %s138 = sor.u32 %s136, %s137
    %s139 = sand.u32 15, %s138
    %v140 = vld [vmem:[%s130] sm:%s139]
    %v141 = vunpack.c.l.bf16 %v140
    %v142 = vunpack.c.h.bf16 %v140
    %v143 = vlaneseq
    %v144 = vand.u32 %v143, 127
    %vm146 = vcmp.lt.s32.totalorder %v144, 28
    %v147 = vsel %vm146, %v141, %v13
    %s148 = scalar_lea.vmem [#allocation15], 16
    %v149 = vpack.c.bf16 0.0, %v147
    %s151 = ssub.s32 16, 1
    %152 = vst [vmem:[%s148] sm:%s151] %v149
    %s153 = scalar_lea.vmem %s5, 20
    %s155 = sor.u32 255, 127
    %s156 = sand.u32 %s155, 85
    %s157 = sshrl.u32 %s156, 1
    %s158 = sor.u32 %s156, %s157
    %s159 = sand.u32 51, %s158
    %s160 = sshrl.u32 %s159, 2
    %s161 = sor.u32 %s159, %s160
    %s162 = sand.u32 15, %s161
    %v163 = vld [vmem:[%s153] sm:%s162]
    %v164 = vunpack.c.l.bf16 %v163
    %v165 = vunpack.c.h.bf16 %v163
    %v166 = vlaneseq
    %v167 = vand.u32 %v166, 127
    %vm169 = vcmp.lt.s32.totalorder %v167, 28
    %v170 = vsel %vm169, %v164, %v13
    %s171 = scalar_lea.vmem [#allocation15], 20
    %v172 = vpack.c.bf16 0.0, %v170
    %s174 = ssub.s32 16, 1
    %175 = vst [vmem:[%s171] sm:%s174] %v172
    %s176 = scalar_lea.vmem %s5, 24
    %s178 = sor.u32 255, 127
    %s179 = sand.u32 %s178, 85
    %s180 = sshrl.u32 %s179, 1
    %s181 = sor.u32 %s179, %s180
    %s182 = sand.u32 51, %s181
    %s183 = sshrl.u32 %s182, 2
    %s184 = sor.u32 %s182, %s183
    %s185 = sand.u32 15, %s184
    %v186 = vld [vmem:[%s176] sm:%s185]
    %v187 = vunpack.c.l.bf16 %v186
    %v188 = vunpack.c.h.bf16 %v186
    %v189 = vlaneseq
    %v190 = vand.u32 %v189, 127
    %vm192 = vcmp.lt.s32.totalorder %v190, 28
    %v193 = vsel %vm192, %v187, %v13
    %s194 = scalar_lea.vmem [#allocation15], 24
    %v195 = vpack.c.bf16 0.0, %v193
    %s197 = ssub.s32 16, 1
    %198 = vst [vmem:[%s194] sm:%s197] %v195
    %s199 = scalar_lea.vmem %s5, 28
    %s201 = sor.u32 255, 127
    %s202 = sand.u32 %s201, 85
    %s203 = sshrl.u32 %s202, 1
    %s204 = sor.u32 %s202, %s203
    %s205 = sand.u32 51, %s204
    %s206 = sshrl.u32 %s205, 2
    %s207 = sor.u32 %s205, %s206
    %s208 = sand.u32 15, %s207
    %v209 = vld [vmem:[%s199] sm:%s208]
    %v210 = vunpack.c.l.bf16 %v209
    %v211 = vunpack.c.h.bf16 %v209
    %v212 = vlaneseq
    %v213 = vand.u32 %v212, 127
    %vm215 = vcmp.lt.s32.totalorder %v213, 28
    %v216 = vsel %vm215, %v210, %v13
    %s217 = scalar_lea.vmem [#allocation15], 28
    %v218 = vpack.c.bf16 0.0, %v216
    %s220 = ssub.s32 16, 1
    %221 = vst [vmem:[%s217] sm:%s220] %v218
    %p224 = scmp.lt.u32.totalorder 64, 8
    %p225 = pneg %p224
    // Predicated region
    $region22: #{lstm_model_forward.2} parent=1 // pred_check
      _
    $region23: #{lstm_model_forward.2} parent=1 // pred_check_branch
      %227 = sbr.rel (%p224) target = $region25
    $region24: #{lstm_model_forward.2} parent=1 // pred_region
      %s243 = sand.u32 64, 7
      %p244 = scmp.eq.s32.totalorder %s243, 0
      // Predicated region
      $region37: #{lstm_model_forward.2} parent=24 // pred_check
        %p245 = pneg %p244
      $region38: #{lstm_model_forward.2} parent=24 // pred_check_branch
        %247 = sbr.rel (%p245) target = $region40
      $region39: #{lstm_model_forward.2} parent=24 // pred_region
        loop: start=0, step=1, limit=1
        $region41: #{lstm_model_forward.2} parent=39 // loop_pre_header
          _
        $region42: #{lstm_model_forward.2} parent=39 // loop_header
          %s249 = sphi 0, %s253
          %p250 = scmp.ge.s32.totalorder %s249, 1
          %s254 = sphi %s3, %s3
          %s255 = sphi [#allocation3], [#allocation3]
        $region43: #{lstm_model_forward.2} parent=39 // loop_header_branch
          %252 = sbr.rel (%p250) target = $region47
        $region44: #{lstm_model_forward.2} parent=39 // loop_body
          %v256 = vld [vmem:[%s254] sm:$0xff]
          %257 = vst [vmem:[%s255] sm:$0xff] %v256
          %v258 = vld [vmem:[%s254 + $0x8] sm:$0xff]
          %259 = vst [vmem:[%s255 + $0x8] sm:$0xff] %v258
          %v260 = vld [vmem:[%s254 + $0x10] sm:$0xff]
          %261 = vst [vmem:[%s255 + $0x10] sm:$0xff] %v260
          %v262 = vld [vmem:[%s254 + $0x18] sm:$0xff]
          %263 = vst [vmem:[%s255 + $0x18] sm:$0xff] %v262
          %v264 = vld [vmem:[%s254 + $0x20] sm:$0xff]
          %265 = vst [vmem:[%s255 + $0x20] sm:$0xff] %v264
          %v266 = vld [vmem:[%s254 + $0x28] sm:$0xff]
          %267 = vst [vmem:[%s255 + $0x28] sm:$0xff] %v266
          %v268 = vld [vmem:[%s254 + $0x30] sm:$0xff]
          %269 = vst [vmem:[%s255 + $0x30] sm:$0xff] %v268
          %v270 = vld [vmem:[%s254 + $0x38] sm:$0xff]
          %271 = vst [vmem:[%s255 + $0x38] sm:$0xff] %v270
        $region45: #{lstm_model_forward.2} parent=39 // loop_footer
          %s253 = sadd.s32 1, %s249
        $region46: #{lstm_model_forward.2} parent=39 // loop_footer_branch
          %248 = sbr.rel target = $region42
        $region47: #{lstm_model_forward.2} parent=39 // loop_exit
          _
      $region40: #{lstm_model_forward.2} parent=24 // pred_fallthru
        _
      %p272 = pneg %p244
      // Predicated region
      $region48: #{lstm_model_forward.2} parent=24 // pred_check
        _
      $region49: #{lstm_model_forward.2} parent=24 // pred_check_branch
        %274 = sbr.rel (%p244) target = $region51
      $region50: #{lstm_model_forward.2} parent=24 // pred_region
        %s275 = sand.u32 64, 7
      $region51: #{lstm_model_forward.2} parent=24 // pred_fallthru
        _
    $region25: #{lstm_model_forward.2} parent=1 // pred_fallthru
      _
    // Predicated region
    $region26: #{lstm_model_forward.2} parent=1 // pred_check
      %p228 = pneg %p224
    $region27: #{lstm_model_forward.2} parent=1 // pred_check_branch
      %230 = sbr.rel (%p228) target = $region29
    $region28: #{lstm_model_forward.2} parent=1 // pred_region
      %s231 = sshll.u32 1, 64
      %s232 = ssub.s32 %s231, 1
      loop: start=0, step=1, limit=1
      $region30: #{lstm_model_forward.2} parent=28 // loop_pre_header
        _
      $region31: #{lstm_model_forward.2} parent=28 // loop_header
        %s234 = sphi 0, %s238
        %p235 = scmp.ge.s32.totalorder %s234, 1
        %s239 = sphi %s3, %s3
        %s240 = sphi [#allocation3], [#allocation3]
      $region32: #{lstm_model_forward.2} parent=28 // loop_header_branch
        %237 = sbr.rel (%p235) target = $region36
      $region33: #{lstm_model_forward.2} parent=28 // loop_body
        %v241 = vld [vmem:[%s239] sm:%s232]
        %242 = vst [vmem:[%s240] sm:%s232] %v241
      $region34: #{lstm_model_forward.2} parent=28 // loop_footer
        %s238 = sadd.s32 1, %s234
      $region35: #{lstm_model_forward.2} parent=28 // loop_footer_branch
        %233 = sbr.rel target = $region31
      $region36: #{lstm_model_forward.2} parent=28 // loop_exit
        _
    $region29: #{lstm_model_forward.2} parent=1 // pred_fallthru
      _
    // Predicated region
    $region52: #{lstm_model_forward.2} parent=1 // pred_check
      _
    $region53: #{lstm_model_forward.2} parent=1 // pred_check_branch
      %278 = sbr.rel (0) target = $region55
    $region54: #{lstm_model_forward.2} parent=1 // pred_region
      %279 = vsyncadd [#allocation5], 1024
    $region55: #{lstm_model_forward.2} parent=1 // pred_fallthru
      _
    %s280 = scalar_lea.sflag [#allocation5], 1
    %p282 = scmp.lt.u32.totalorder 1, 8
    %p283 = pneg %p282
    // Predicated region
    $region56: #{lstm_model_forward.2} parent=1 // pred_check
      _
    $region57: #{lstm_model_forward.2} parent=1 // pred_check_branch
      %285 = sbr.rel (%p282) target = $region59
    $region58: #{lstm_model_forward.2} parent=1 // pred_region
      %s301 = sand.u32 1, 7
      %p302 = scmp.eq.s32.totalorder %s301, 0
      %p303 = pneg %p302
      // Predicated region
      $region71: #{lstm_model_forward.2} parent=58 // pred_check
        _
      $region72: #{lstm_model_forward.2} parent=58 // pred_check_branch
        %305 = sbr.rel (%p302) target = $region74
      $region73: #{lstm_model_forward.2} parent=58 // pred_region
        %s306 = sand.u32 1, 7
        %s307 = ssub.s32 1, %s306
        %s308 = scalar_lea.vmem %s4, %s307
        %s309 = ssub.s32 1, %s306
        %s310 = scalar_lea.vmem [#allocation4], %s309
        %s311 = sshll.u32 1, %s306
        %s312 = ssub.s32 %s311, 1
        loop: start=0, step=1, limit=1
        $region75: #{lstm_model_forward.2} parent=73 // loop_pre_header
          _
        $region76: #{lstm_model_forward.2} parent=73 // loop_header
          %s314 = sphi 0, %s318
          %p315 = scmp.ge.s32.totalorder %s314, 1
          %s319 = sphi %s308, %s308
          %s320 = sphi %s310, %s310
        $region77: #{lstm_model_forward.2} parent=73 // loop_header_branch
          %317 = sbr.rel (%p315) target = $region81
        $region78: #{lstm_model_forward.2} parent=73 // loop_body
          %v321 = vld [vmem:[%s319] sm:%s312]
          %322 = vst [vmem:[%s320] sm:%s312] %v321
        $region79: #{lstm_model_forward.2} parent=73 // loop_footer
          %s318 = sadd.s32 1, %s314
        $region80: #{lstm_model_forward.2} parent=73 // loop_footer_branch
          %313 = sbr.rel target = $region76
        $region81: #{lstm_model_forward.2} parent=73 // loop_exit
          _
      $region74: #{lstm_model_forward.2} parent=58 // pred_fallthru
        _
    $region59: #{lstm_model_forward.2} parent=1 // pred_fallthru
      _
    // Predicated region
    $region60: #{lstm_model_forward.2} parent=1 // pred_check
      %p286 = pneg %p282
    $region61: #{lstm_model_forward.2} parent=1 // pred_check_branch
      %288 = sbr.rel (%p286) target = $region63
    $region62: #{lstm_model_forward.2} parent=1 // pred_region
      %s289 = sshll.u32 1, 1
      %s290 = ssub.s32 %s289, 1
      loop: start=0, step=1, limit=1
      $region64: #{lstm_model_forward.2} parent=62 // loop_pre_header
        _
      $region65: #{lstm_model_forward.2} parent=62 // loop_header
        %s292 = sphi 0, %s296
        %p293 = scmp.ge.s32.totalorder %s292, 1
        %s297 = sphi %s4, %s4
        %s298 = sphi [#allocation4], [#allocation4]
      $region66: #{lstm_model_forward.2} parent=62 // loop_header_branch
        %295 = sbr.rel (%p293) target = $region70
      $region67: #{lstm_model_forward.2} parent=62 // loop_body
        %v299 = vld [vmem:[%s297] sm:%s290]
        %300 = vst [vmem:[%s298] sm:%s290] %v299
      $region68: #{lstm_model_forward.2} parent=62 // loop_footer
        %s296 = sadd.s32 1, %s292
      $region69: #{lstm_model_forward.2} parent=62 // loop_footer_branch
        %291 = sbr.rel target = $region65
      $region70: #{lstm_model_forward.2} parent=62 // loop_exit
        _
    $region63: #{lstm_model_forward.2} parent=1 // pred_fallthru
      _
    // Predicated region
    $region82: #{lstm_model_forward.2} parent=1 // pred_check
      _
    $region83: #{lstm_model_forward.2} parent=1 // pred_check_branch
      %325 = sbr.rel (0) target = $region85
    $region84: #{lstm_model_forward.2} parent=1 // pred_region
      %326 = vsyncadd %s280, 16
    $region85: #{lstm_model_forward.2} parent=1 // pred_fallthru
      _
    %v327 = vld [vmem:[#allocation15] sm:$0xf]
    %v328 = vld [vmem:[#allocation15 + $0x4] sm:$0xf]
    %v329 = vld [vmem:[#allocation15 + $0x8] sm:$0xf]
    %v330 = vld [vmem:[#allocation15 + $0xc] sm:$0xf]
    %v331 = vld [vmem:[#allocation15 + $0x10] sm:$0xf]
    %v332 = vld [vmem:[#allocation15 + $0x14] sm:$0xf]
    %v333 = vld [vmem:[#allocation15 + $0x18] sm:$0xf]
    %v334 = vld [vmem:[#allocation15 + $0x1c] sm:$0xf]
    %v335 = vld [vmem:[%s0] sm:$0xff]
    %v336 = vld [vmem:[%s0 + $0x8] sm:$0xff]
    %v337 = vld [vmem:[%s0 + $0x10] sm:$0xff]
    %v338 = vld [vmem:[%s0 + $0x18] sm:$0xff]
    %v339 = vld [vmem:[%s0 + $0x20] sm:$0xff]
    %v340 = vld [vmem:[%s0 + $0x28] sm:$0xff]
    %v341 = vld [vmem:[%s0 + $0x30] sm:$0xff]
    %v342 = vld [vmem:[%s0 + $0x38] sm:$0xff]
    %v343 = vld [vmem:[%s2] sm:$0xf]
    %v345 = vlaneseq
    %v346 = vshrl.u32 %v345, 7
    %v347 = vsub.s32 0, %v346
    %v348 = vrot.slane %v343, %v347
    %v349 = vlaneseq
    %v350 = vshrl.u32 %v349, 7
    %v351 = vsub.s32 1, %v350
    %v352 = vrot.slane %v343, %v351
    %v353 = vlaneseq
    %v354 = vshrl.u32 %v353, 7
    %v355 = vsub.s32 2, %v354
    %v356 = vrot.slane %v343, %v355
    %v357 = vlaneseq
    %v358 = vshrl.u32 %v357, 7
    %v359 = vsub.s32 3, %v358
    %v360 = vrot.slane %v343, %v359
    %v373 = vunpack.c.l.b16 %v327
    %v374 = vunpack.c.l.b16 %v328
    %v375 = vunpack.c.l.b16 %v329
    %v376 = vunpack.c.l.b16 %v330
    %v377 = vunpack.c.l.b16 %v331
    %v378 = vunpack.c.l.b16 %v332
    %v379 = vunpack.c.l.b16 %v333
    %v380 = vunpack.c.l.b16 %v334
    %v381 = vpack.c.b16 %v374, %v373
    %v382 = vpack.c.b16 %v376, %v375
    %v383 = vpack.c.b16 %v378, %v377
    %v384 = vpack.c.b16 %v380, %v379
    %v393 = vunpack.c.l.b16 %v335
    %v394 = vunpack.c.h.b16 %v335
    %v395 = vunpack.c.l.b16 %v336
    %v396 = vunpack.c.h.b16 %v336
    %v397 = vunpack.c.l.b16 %v337
    %v398 = vunpack.c.h.b16 %v337
    %v399 = vunpack.c.l.b16 %v338
    %v400 = vunpack.c.h.b16 %v338
    %v401 = vunpack.c.l.b16 %v339
    %v402 = vunpack.c.h.b16 %v339
    %v403 = vunpack.c.l.b16 %v340
    %v404 = vunpack.c.h.b16 %v340
    %v405 = vunpack.c.l.b16 %v341
    %v406 = vunpack.c.h.b16 %v341
    %v407 = vunpack.c.l.b16 %v342
    %v408 = vunpack.c.h.b16 %v342
    %v409 = vpack.c.b16 %v397, %v393
    %v410 = vpack.c.b16 %v398, %v394
    %v411 = vpack.c.b16 %v399, %v395
    %v412 = vpack.c.b16 %v400, %v396
    %v413 = vpack.c.b16 %v405, %v401
    %v414 = vpack.c.b16 %v406, %v402
    %v415 = vpack.c.b16 %v407, %v403
    %v416 = vpack.c.b16 %v408, %v404
    %vm425 = vcmask 261120
    %v427 = vsel %vm425, %v381, 0
    %v430 = vsel %vm425, %v382, 0
    %v433 = vsel %vm425, %v383, 0
    %v436 = vsel %vm425, %v384, 0
    %438 = vmatprep.subr.bf16.mxu0 0
    %439 = vmatpush1.bf16.msra.mxu0 0
    %440 = vmatprep.subr.bf16.mxu0 0
    %441 = vmatpush1.bf16.msra.mxu0 0
    %442 = vmatprep.subr.bf16.mxu0 0
    %443 = vmatpush1.bf16.msra.mxu0 0
    %444 = vmatprep.subr.bf16.mxu0 0
    %445 = vmatpush1.bf16.msra.mxu0 0
    %446 = vmatprep.subr.bf16.mxu0 0
    %447 = vmatpush1.bf16.msra.mxu0 0
    %448 = vmatprep.subr.bf16.mxu0 0
    %449 = vmatpush1.bf16.msra.mxu0 0
    %450 = vmatprep.subr.bf16.mxu0 %v414
    %451 = vmatpush1.bf16.msra.mxu0 %v413
    %452 = vmatprep.subr.bf16.mxu0 %v410
    %453 = vmatpush1.bf16.msra.mxu0 %v409
    %454 = vmatprep.subr.bf16.mxu0 0
    %455 = vmatpush2.bf16.msra.mxu0 0
    %456 = vmatprep.subr.bf16.mxu0 0
    %457 = vmatpush2.bf16.msra.mxu0 0
    %458 = vmatprep.subr.bf16.mxu0 0
    %459 = vmatpush2.bf16.msra.mxu0 0
    %460 = vmatprep.subr.bf16.mxu0 0
    %461 = vmatpush2.bf16.msra.mxu0 0
    %462 = vmatprep.subr.bf16.mxu0 0
    %463 = vmatpush2.bf16.msra.mxu0 0
    %464 = vmatprep.subr.bf16.mxu0 0
    %465 = vmatpush2.bf16.msra.mxu0 0
    %466 = vmatprep.subr.bf16.mxu0 0
    %467 = vmatpush2.bf16.msra.mxu0 0
    %468 = vmatprep.subr.bf16.mxu0 0
    %469 = vmatpush2.bf16.msra.mxu0 0
    %470 = vmatprep.mubr.bf16.mxu0 0
    %471 = vmatmul.mubr.bf16.gmra.mxu0 %v427
    %v472 = vpop.f32.mrf.mxu0
    %v473 = vadd.f32 %v348, %v472
    %v474 = vpop.f32.mrf.mxu0
    %v475 = vadd.f32 %v352, %v474
    %v476 = vpop.f32.mrf.mxu0
    %v477 = vadd.f32 %v348, %v476
    %v478 = vpop.f32.mrf.mxu0
    %v479 = vadd.f32 %v352, %v478
    %480 = vmatprep.mubr.bf16.mxu0 0
    %481 = vmatmul.mubr.bf16.gmra.mxu0 %v430
    %v482 = vpop.f32.mrf.mxu0
    %v483 = vadd.f32 %v348, %v482
    %v484 = vpop.f32.mrf.mxu0
    %v485 = vadd.f32 %v352, %v484
    %v486 = vpop.f32.mrf.mxu0
    %v487 = vadd.f32 %v348, %v486
    %v488 = vpop.f32.mrf.mxu0
    %v489 = vadd.f32 %v352, %v488
    %490 = vmatprep.mubr.bf16.mxu0 0
    %491 = vmatmul.mubr.bf16.gmra.mxu0 %v433
    %v492 = vpop.f32.mrf.mxu0
    %v493 = vadd.f32 %v348, %v492
    %v494 = vpop.f32.mrf.mxu0
    %v495 = vadd.f32 %v352, %v494
    %v496 = vpop.f32.mrf.mxu0
    %v497 = vadd.f32 %v348, %v496
    %v498 = vpop.f32.mrf.mxu0
    %v499 = vadd.f32 %v352, %v498
    %500 = vmatprep.mubr.bf16.mxu0 0
    %501 = vmatmul.mubr.bf16.gmra.mxu0 %v436
    %v502 = vpop.f32.mrf.mxu0
    %v503 = vadd.f32 %v348, %v502
    %v504 = vpop.f32.mrf.mxu0
    %v505 = vadd.f32 %v352, %v504
    %v506 = vpop.f32.mrf.mxu0
    %v507 = vadd.f32 %v348, %v506
    %v508 = vpop.f32.mrf.mxu0
    %v509 = vadd.f32 %v352, %v508
    %510 = vdwg.mxu0
    %511 = vmatprep.subr.bf16.mxu0 0
    %512 = vmatpush1.bf16.msra.mxu0 0
    %513 = vmatprep.subr.bf16.mxu0 0
    %514 = vmatpush1.bf16.msra.mxu0 0
    %515 = vmatprep.subr.bf16.mxu0 0
    %516 = vmatpush1.bf16.msra.mxu0 0
    %517 = vmatprep.subr.bf16.mxu0 0
    %518 = vmatpush1.bf16.msra.mxu0 0
    %519 = vmatprep.subr.bf16.mxu0 0
    %520 = vmatpush1.bf16.msra.mxu0 0
    %521 = vmatprep.subr.bf16.mxu0 0
    %522 = vmatpush1.bf16.msra.mxu0 0
    %523 = vmatprep.subr.bf16.mxu0 %v416
    %524 = vmatpush1.bf16.msra.mxu0 %v415
    %525 = vmatprep.subr.bf16.mxu0 %v412
    %526 = vmatpush1.bf16.msra.mxu0 %v411
    %527 = vmatprep.subr.bf16.mxu0 0
    %528 = vmatpush2.bf16.msra.mxu0 0
    %529 = vmatprep.subr.bf16.mxu0 0
    %530 = vmatpush2.bf16.msra.mxu0 0
    %531 = vmatprep.subr.bf16.mxu0 0
    %532 = vmatpush2.bf16.msra.mxu0 0
    %533 = vmatprep.subr.bf16.mxu0 0
    %534 = vmatpush2.bf16.msra.mxu0 0
    %535 = vmatprep.subr.bf16.mxu0 0
    %536 = vmatpush2.bf16.msra.mxu0 0
    %537 = vmatprep.subr.bf16.mxu0 0
    %538 = vmatpush2.bf16.msra.mxu0 0
    %539 = vmatprep.subr.bf16.mxu0 0
    %540 = vmatpush2.bf16.msra.mxu0 0
    %541 = vmatprep.subr.bf16.mxu0 0
    %542 = vmatpush2.bf16.msra.mxu0 0
    %543 = vmatprep.mubr.bf16.mxu0 0
    %544 = vmatmul.mubr.bf16.gmra.mxu0 %v427
    %v545 = vpop.f32.mrf.mxu0
    %v546 = vadd.f32 %v356, %v545
    %v547 = vpop.f32.mrf.mxu0
    %v548 = vadd.f32 %v360, %v547
    %v549 = vpop.f32.mrf.mxu0
    %v550 = vadd.f32 %v356, %v549
    %v551 = vpop.f32.mrf.mxu0
    %v552 = vadd.f32 %v360, %v551
    %553 = vmatprep.mubr.bf16.mxu0 0
    %554 = vmatmul.mubr.bf16.gmra.mxu0 %v430
    %v555 = vpop.f32.mrf.mxu0
    %v556 = vadd.f32 %v356, %v555
    %v557 = vpop.f32.mrf.mxu0
    %v558 = vadd.f32 %v360, %v557
    %v559 = vpop.f32.mrf.mxu0
    %v560 = vadd.f32 %v356, %v559
    %v561 = vpop.f32.mrf.mxu0
    %v562 = vadd.f32 %v360, %v561
    %563 = vmatprep.mubr.bf16.mxu0 0
    %564 = vmatmul.mubr.bf16.gmra.mxu0 %v433
    %v565 = vpop.f32.mrf.mxu0
    %v566 = vadd.f32 %v356, %v565
    %v567 = vpop.f32.mrf.mxu0
    %v568 = vadd.f32 %v360, %v567
    %v569 = vpop.f32.mrf.mxu0
    %v570 = vadd.f32 %v356, %v569
    %v571 = vpop.f32.mrf.mxu0
    %v572 = vadd.f32 %v360, %v571
    %573 = vmatprep.mubr.bf16.mxu0 0
    %574 = vmatmul.mubr.bf16.gmra.mxu0 %v436
    %v575 = vpop.f32.mrf.mxu0
    %v576 = vadd.f32 %v356, %v575
    %v577 = vpop.f32.mrf.mxu0
    %v578 = vadd.f32 %v360, %v577
    %v579 = vpop.f32.mrf.mxu0
    %v580 = vadd.f32 %v356, %v579
    %v581 = vpop.f32.mrf.mxu0
    %v582 = vadd.f32 %v360, %v581
    %583 = vdwg.mxu0
    %584 = vst [vmem:[#allocation2] sm:$0xff] %v473
    %585 = vst [vmem:[#allocation2 + $0x8] sm:$0xff] %v475
    %586 = vst [vmem:[#allocation2 + $0x10] sm:$0xff] %v546
    %587 = vst [vmem:[#allocation2 + $0x18] sm:$0xff] %v548
    %588 = vst [vmem:[#allocation2 + $0x20] sm:$0xff] %v477
    %589 = vst [vmem:[#allocation2 + $0x28] sm:$0xff] %v479
    %590 = vst [vmem:[#allocation2 + $0x30] sm:$0xff] %v550
    %591 = vst [vmem:[#allocation2 + $0x38] sm:$0xff] %v552
    %592 = vst [vmem:[#allocation2 + $0x40] sm:$0xff] %v483
    %593 = vst [vmem:[#allocation2 + $0x48] sm:$0xff] %v485
    %594 = vst [vmem:[#allocation2 + $0x50] sm:$0xff] %v556
    %595 = vst [vmem:[#allocation2 + $0x58] sm:$0xff] %v558
    %596 = vst [vmem:[#allocation2 + $0x60] sm:$0xff] %v487
    %597 = vst [vmem:[#allocation2 + $0x68] sm:$0xff] %v489
    %598 = vst [vmem:[#allocation2 + $0x70] sm:$0xff] %v560
    %599 = vst [vmem:[#allocation2 + $0x78] sm:$0xff] %v562
    %600 = vst [vmem:[#allocation2 + $0x80] sm:$0xff] %v493
    %601 = vst [vmem:[#allocation2 + $0x88] sm:$0xff] %v495
    %602 = vst [vmem:[#allocation2 + $0x90] sm:$0xff] %v566
    %603 = vst [vmem:[#allocation2 + $0x98] sm:$0xff] %v568
    %604 = vst [vmem:[#allocation2 + $0xa0] sm:$0xff] %v497
    %605 = vst [vmem:[#allocation2 + $0xa8] sm:$0xff] %v499
    %606 = vst [vmem:[#allocation2 + $0xb0] sm:$0xff] %v570
    %607 = vst [vmem:[#allocation2 + $0xb8] sm:$0xff] %v572
    %608 = vst [vmem:[#allocation2 + $0xc0] sm:$0xff] %v503
    %609 = vst [vmem:[#allocation2 + $0xc8] sm:$0xff] %v505
    %610 = vst [vmem:[#allocation2 + $0xd0] sm:$0xff] %v576
    %611 = vst [vmem:[#allocation2 + $0xd8] sm:$0xff] %v578
    %612 = vst [vmem:[#allocation2 + $0xe0] sm:$0xff] %v507
    %613 = vst [vmem:[#allocation2 + $0xe8] sm:$0xff] %v509
    %614 = vst [vmem:[#allocation2 + $0xf0] sm:$0xff] %v580
    %615 = vst [vmem:[#allocation2 + $0xf8] sm:$0xff] %v582
    %s616 = smul.u32 0, 4
    %s617 = smul.addr %s616, 8
    %s618 = scalar_lea.vmem [#allocation2], %s617
    %v619 = vld [vmem:[%s618] sm:$0xff]
    %v620 = vld [vmem:[%s618 + $0x8] sm:$0xff]
    %v621 = vld [vmem:[%s618 + $0x10] sm:$0xff]
    %v622 = vld [vmem:[%s618 + $0x18] sm:$0xff]
    %v623 = vld [vmem:[#allocation11] sm:$0xff]
    %v624 = vld [vmem:[#allocation11 + $0x8] sm:$0xff]
    %v625 = vld [vmem:[#allocation11 + $0x10] sm:$0xff]
    %v626 = vld [vmem:[#allocation11 + $0x18] sm:$0xff]
    %v627 = vld [vmem:[#allocation11 + $0x20] sm:$0xff]
    %v628 = vld [vmem:[#allocation11 + $0x28] sm:$0xff]
    %v629 = vld [vmem:[#allocation11 + $0x30] sm:$0xff]
    %v630 = vld [vmem:[#allocation11 + $0x38] sm:$0xff]
    %v631 = vld [vmem:[#allocation11 + $0x40] sm:$0xff]
    %v632 = vld [vmem:[#allocation11 + $0x48] sm:$0xff]
    %v633 = vld [vmem:[#allocation11 + $0x50] sm:$0xff]
    %v634 = vld [vmem:[#allocation11 + $0x58] sm:$0xff]
    %v635 = vld [vmem:[#allocation11 + $0x60] sm:$0xff]
    %v636 = vld [vmem:[#allocation11 + $0x68] sm:$0xff]
    %v637 = vld [vmem:[#allocation11 + $0x70] sm:$0xff]
    %v638 = vld [vmem:[#allocation11 + $0x78] sm:$0xff]
    %v639 = vld [vmem:[#allocation11 + $0x80] sm:$0xff]
    %v640 = vld [vmem:[#allocation11 + $0x88] sm:$0xff]
    %v641 = vld [vmem:[#allocation11 + $0x90] sm:$0xff]
    %v642 = vld [vmem:[#allocation11 + $0x98] sm:$0xff]
    %v643 = vld [vmem:[#allocation11 + $0xa0] sm:$0xff]
    %v644 = vld [vmem:[#allocation11 + $0xa8] sm:$0xff]
    %v645 = vld [vmem:[#allocation11 + $0xb0] sm:$0xff]
    %v646 = vld [vmem:[#allocation11 + $0xb8] sm:$0xff]
    %v647 = vld [vmem:[#allocation11 + $0xc0] sm:$0xff]
    %v648 = vld [vmem:[#allocation11 + $0xc8] sm:$0xff]
    %v649 = vld [vmem:[#allocation11 + $0xd0] sm:$0xff]
    %v650 = vld [vmem:[#allocation11 + $0xd8] sm:$0xff]
    %v651 = vld [vmem:[#allocation11 + $0xe0] sm:$0xff]
    %v652 = vld [vmem:[#allocation11 + $0xe8] sm:$0xff]
    %v653 = vld [vmem:[#allocation11 + $0xf0] sm:$0xff]
    %v654 = vld [vmem:[#allocation11 + $0xf8] sm:$0xff]
    %v687 = vunpack.c.l.b16 %v623
    %v688 = vunpack.c.h.b16 %v623
    %v689 = vunpack.c.l.b16 %v624
    %v690 = vunpack.c.h.b16 %v624
    %v691 = vunpack.c.l.b16 %v625
    %v692 = vunpack.c.h.b16 %v625
    %v693 = vunpack.c.l.b16 %v626
    %v694 = vunpack.c.h.b16 %v626
    %v695 = vunpack.c.l.b16 %v627
    %v696 = vunpack.c.h.b16 %v627
    %v697 = vunpack.c.l.b16 %v628
    %v698 = vunpack.c.h.b16 %v628
    %v699 = vunpack.c.l.b16 %v629
    %v700 = vunpack.c.h.b16 %v629
    %v701 = vunpack.c.l.b16 %v630
    %v702 = vunpack.c.h.b16 %v630
    %v703 = vunpack.c.l.b16 %v631
    %v704 = vunpack.c.h.b16 %v631
    %v705 = vunpack.c.l.b16 %v632
    %v706 = vunpack.c.h.b16 %v632
    %v707 = vunpack.c.l.b16 %v633
    %v708 = vunpack.c.h.b16 %v633
    %v709 = vunpack.c.l.b16 %v634
    %v710 = vunpack.c.h.b16 %v634
    %v711 = vunpack.c.l.b16 %v635
    %v712 = vunpack.c.h.b16 %v635
    %v713 = vunpack.c.l.b16 %v636
    %v714 = vunpack.c.h.b16 %v636
    %v715 = vunpack.c.l.b16 %v637
    %v716 = vunpack.c.h.b16 %v637
    %v717 = vunpack.c.l.b16 %v638
    %v718 = vunpack.c.h.b16 %v638
    %v719 = vunpack.c.l.b16 %v639
    %v720 = vunpack.c.h.b16 %v639
    %v721 = vunpack.c.l.b16 %v640
    %v722 = vunpack.c.h.b16 %v640
    %v723 = vunpack.c.l.b16 %v641
    %v724 = vunpack.c.h.b16 %v641
    %v725 = vunpack.c.l.b16 %v642
    %v726 = vunpack.c.h.b16 %v642
    %v727 = vunpack.c.l.b16 %v643
    %v728 = vunpack.c.h.b16 %v643
    %v729 = vunpack.c.l.b16 %v644
    %v730 = vunpack.c.h.b16 %v644
    %v731 = vunpack.c.l.b16 %v645
    %v732 = vunpack.c.h.b16 %v645
    %v733 = vunpack.c.l.b16 %v646
    %v734 = vunpack.c.h.b16 %v646
    %v735 = vunpack.c.l.b16 %v647
    %v736 = vunpack.c.h.b16 %v647
    %v737 = vunpack.c.l.b16 %v648
    %v738 = vunpack.c.h.b16 %v648
    %v739 = vunpack.c.l.b16 %v649
    %v740 = vunpack.c.h.b16 %v649
    %v741 = vunpack.c.l.b16 %v650
    %v742 = vunpack.c.h.b16 %v650
    %v743 = vunpack.c.l.b16 %v651
    %v744 = vunpack.c.h.b16 %v651
    %v745 = vunpack.c.l.b16 %v652
    %v746 = vunpack.c.h.b16 %v652
    %v747 = vunpack.c.l.b16 %v653
    %v748 = vunpack.c.h.b16 %v653
    %v749 = vunpack.c.l.b16 %v654
    %v750 = vunpack.c.h.b16 %v654
    %v751 = vpack.c.b16 %v691, %v687
    %v752 = vpack.c.b16 %v692, %v688
    %v753 = vpack.c.b16 %v693, %v689
    %v754 = vpack.c.b16 %v694, %v690
    %v755 = vpack.c.b16 %v699, %v695
    %v756 = vpack.c.b16 %v700, %v696
    %v757 = vpack.c.b16 %v701, %v697
    %v758 = vpack.c.b16 %v702, %v698
    %v759 = vpack.c.b16 %v707, %v703
    %v760 = vpack.c.b16 %v708, %v704
    %v761 = vpack.c.b16 %v709, %v705
    %v762 = vpack.c.b16 %v710, %v706
    %v763 = vpack.c.b16 %v715, %v711
    %v764 = vpack.c.b16 %v716, %v712
    %v765 = vpack.c.b16 %v717, %v713
    %v766 = vpack.c.b16 %v718, %v714
    %v767 = vpack.c.b16 %v723, %v719
    %v768 = vpack.c.b16 %v724, %v720
    %v769 = vpack.c.b16 %v725, %v721
    %v770 = vpack.c.b16 %v726, %v722
    %v771 = vpack.c.b16 %v731, %v727
    %v772 = vpack.c.b16 %v732, %v728
    %v773 = vpack.c.b16 %v733, %v729
    %v774 = vpack.c.b16 %v734, %v730
    %v775 = vpack.c.b16 %v739, %v735
    %v776 = vpack.c.b16 %v740, %v736
    %v777 = vpack.c.b16 %v741, %v737
    %v778 = vpack.c.b16 %v742, %v738
    %v779 = vpack.c.b16 %v747, %v743
    %v780 = vpack.c.b16 %v748, %v744
    %v781 = vpack.c.b16 %v749, %v745
    %v782 = vpack.c.b16 %v750, %v746
    %815 = vmatprep.subr.bf16.mxu0 %v780
    %816 = vmatpush1.bf16.msra.mxu0 %v779
    %817 = vmatprep.subr.bf16.mxu0 %v776
    %818 = vmatpush1.bf16.msra.mxu0 %v775
    %819 = vmatprep.subr.bf16.mxu0 %v772
    %820 = vmatpush1.bf16.msra.mxu0 %v771
    %821 = vmatprep.subr.bf16.mxu0 %v768
    %822 = vmatpush1.bf16.msra.mxu0 %v767
    %823 = vmatprep.subr.bf16.mxu0 %v764
    %824 = vmatpush1.bf16.msra.mxu0 %v763
    %825 = vmatprep.subr.bf16.mxu0 %v760
    %826 = vmatpush1.bf16.msra.mxu0 %v759
    %827 = vmatprep.subr.bf16.mxu0 %v756
    %828 = vmatpush1.bf16.msra.mxu0 %v755
    %829 = vmatprep.subr.bf16.mxu0 %v752
    %830 = vmatpush1.bf16.msra.mxu0 %v751
    %831 = vmatprep.subr.bf16.mxu0 0
    %832 = vmatpush2.bf16.msra.mxu0 0
    %833 = vmatprep.subr.bf16.mxu0 0
    %834 = vmatpush2.bf16.msra.mxu0 0
    %835 = vmatprep.subr.bf16.mxu0 0
    %836 = vmatpush2.bf16.msra.mxu0 0
    %837 = vmatprep.subr.bf16.mxu0 0
    %838 = vmatpush2.bf16.msra.mxu0 0
    %839 = vmatprep.subr.bf16.mxu0 0
    %840 = vmatpush2.bf16.msra.mxu0 0
    %841 = vmatprep.subr.bf16.mxu0 0
    %842 = vmatpush2.bf16.msra.mxu0 0
    %843 = vmatprep.subr.bf16.mxu0 0
    %844 = vmatpush2.bf16.msra.mxu0 0
    %845 = vmatprep.subr.bf16.mxu0 0
    %846 = vmatpush2.bf16.msra.mxu0 0
    %847 = vmatprep.mubr.bf16.mxu0 0
    %848 = vmatmul.mubr.bf16.gmra.mxu0 0
    %v849 = vpop.f32.mrf.mxu0
    %v850 = vadd.f32 0.0, %v849
    %v851 = vpop.f32.mrf.mxu0
    %v852 = vadd.f32 0.0, %v851
    %v853 = vpop.f32.mrf.mxu0
    %v854 = vpop.f32.mrf.mxu0
    %855 = vdwg.mxu0
    %856 = vmatprep.subr.bf16.mxu0 %v782
    %857 = vmatpush1.bf16.msra.mxu0 %v781
    %858 = vmatprep.subr.bf16.mxu0 %v778
    %859 = vmatpush1.bf16.msra.mxu0 %v777
    %860 = vmatprep.subr.bf16.mxu0 %v774
    %861 = vmatpush1.bf16.msra.mxu0 %v773
    %862 = vmatprep.subr.bf16.mxu0 %v770
    %863 = vmatpush1.bf16.msra.mxu0 %v769
    %864 = vmatprep.subr.bf16.mxu0 %v766
    %865 = vmatpush1.bf16.msra.mxu0 %v765
    %866 = vmatprep.subr.bf16.mxu0 %v762
    %867 = vmatpush1.bf16.msra.mxu0 %v761
    %868 = vmatprep.subr.bf16.mxu0 %v758
    %869 = vmatpush1.bf16.msra.mxu0 %v757
    %870 = vmatprep.subr.bf16.mxu0 %v754
    %871 = vmatpush1.bf16.msra.mxu0 %v753
    %872 = vmatprep.subr.bf16.mxu0 0
    %873 = vmatpush2.bf16.msra.mxu0 0
    %874 = vmatprep.subr.bf16.mxu0 0
    %875 = vmatpush2.bf16.msra.mxu0 0
    %876 = vmatprep.subr.bf16.mxu0 0
    %877 = vmatpush2.bf16.msra.mxu0 0
    %878 = vmatprep.subr.bf16.mxu0 0
    %879 = vmatpush2.bf16.msra.mxu0 0
    %880 = vmatprep.subr.bf16.mxu0 0
    %881 = vmatpush2.bf16.msra.mxu0 0
    %882 = vmatprep.subr.bf16.mxu0 0
    %883 = vmatpush2.bf16.msra.mxu0 0
    %884 = vmatprep.subr.bf16.mxu0 0
    %885 = vmatpush2.bf16.msra.mxu0 0
    %886 = vmatprep.subr.bf16.mxu0 0
    %887 = vmatpush2.bf16.msra.mxu0 0
    %888 = vmatprep.mubr.bf16.mxu0 0
    %889 = vmatmul.mubr.bf16.gmra.mxu0 0
    %v890 = vpop.f32.mrf.mxu0
    %v891 = vadd.f32 0.0, %v890
    %v892 = vpop.f32.mrf.mxu0
    %v893 = vadd.f32 0.0, %v892
    %v894 = vpop.f32.mrf.mxu0
    %v895 = vpop.f32.mrf.mxu0
    %896 = vdwg.mxu0
    %v897 = vadd.f32 %v619, %v850
    %v898 = vadd.f32 %v620, %v852
    %v899 = vadd.f32 %v621, %v891
    %v900 = vadd.f32 %v622, %v893
    %v901 = vxor.u32 %v897, 2147483648
    %v902 = vmul.f32 %v901, 1.442695
    %v903 = vpow.pop %v902
    %v904 = vadd.f32 %v903, 1.0
    %v905 = vrcp.pop %v904
    %v906 = vmul.f32 1.0, %v905
    %v907 = vxor.u32 %v898, 2147483648
    %v908 = vmul.f32 %v907, 1.442695
    %v909 = vpow.pop %v908
    %v910 = vadd.f32 %v909, 1.0
    %v911 = vrcp.pop %v910
    %v912 = vmul.f32 1.0, %v911
    %v913 = vtanh.pop %v899
    %v914 = vxor.u32 %v900, 2147483648
    %v915 = vmul.f32 %v914, 1.442695
    %v916 = vpow.pop %v915
    %v917 = vadd.f32 %v916, 1.0
    %v918 = vrcp.pop %v917
    %v919 = vmul.f32 1.0, %v918
    %v920 = vmul.f32 %v912, 0.0
    %v921 = vmul.f32 %v906, %v913
    %v922 = vadd.f32 %v920, %v921
    %v923 = vtanh.pop %v922
    %v924 = vmul.f32 %v919, %v923
    %s925 = smul.u32 1, 4
    %s926 = smul.addr %s925, 8
    %s927 = scalar_lea.vmem [#allocation2], %s926
    %v928 = vld [vmem:[%s927] sm:$0xff]
    %v929 = vld [vmem:[%s927 + $0x8] sm:$0xff]
    %v930 = vld [vmem:[%s927 + $0x10] sm:$0xff]
    %v931 = vld [vmem:[%s927 + $0x18] sm:$0xff]
    %v932 = vpack.c.bf16 %v924, %v924
    %933 = vmatprep.subr.bf16.mxu0 %v780
    %934 = vmatpush1.bf16.msra.mxu0 %v779
    %935 = vmatprep.subr.bf16.mxu0 %v776
    %936 = vmatpush1.bf16.msra.mxu0 %v775
    %937 = vmatprep.subr.bf16.mxu0 %v772
    %938 = vmatpush1.bf16.msra.mxu0 %v771
    %939 = vmatprep.subr.bf16.mxu0 %v768
    %940 = vmatpush1.bf16.msra.mxu0 %v767
    %941 = vmatprep.subr.bf16.mxu0 %v764
    %942 = vmatpush1.bf16.msra.mxu0 %v763
    %943 = vmatprep.subr.bf16.mxu0 %v760
    %944 = vmatpush1.bf16.msra.mxu0 %v759
    %945 = vmatprep.subr.bf16.mxu0 %v756
    %946 = vmatpush1.bf16.msra.mxu0 %v755
    %947 = vmatprep.subr.bf16.mxu0 %v752
    %948 = vmatpush1.bf16.msra.mxu0 %v751
    %949 = vmatprep.subr.bf16.mxu0 0
    %950 = vmatpush2.bf16.msra.mxu0 0
    %951 = vmatprep.subr.bf16.mxu0 0
    %952 = vmatpush2.bf16.msra.mxu0 0
    %953 = vmatprep.subr.bf16.mxu0 0
    %954 = vmatpush2.bf16.msra.mxu0 0
    %955 = vmatprep.subr.bf16.mxu0 0
    %956 = vmatpush2.bf16.msra.mxu0 0
    %957 = vmatprep.subr.bf16.mxu0 0
    %958 = vmatpush2.bf16.msra.mxu0 0
    %959 = vmatprep.subr.bf16.mxu0 0
    %960 = vmatpush2.bf16.msra.mxu0 0
    %961 = vmatprep.subr.bf16.mxu0 0
    %962 = vmatpush2.bf16.msra.mxu0 0
    %963 = vmatprep.subr.bf16.mxu0 0
    %964 = vmatpush2.bf16.msra.mxu0 0
    %965 = vmatprep.mubr.bf16.mxu0 0
    %966 = vmatmul.mubr.bf16.gmra.mxu0 %v932
    %v967 = vpop.f32.mrf.mxu0
    %v968 = vadd.f32 0.0, %v967
    %v969 = vpop.f32.mrf.mxu0
    %v970 = vadd.f32 0.0, %v969
    %v971 = vpop.f32.mrf.mxu0
    %v972 = vpop.f32.mrf.mxu0
    %973 = vdwg.mxu0
    %974 = vmatprep.subr.bf16.mxu0 %v782
    %975 = vmatpush1.bf16.msra.mxu0 %v781
    %976 = vmatprep.subr.bf16.mxu0 %v778
    %977 = vmatpush1.bf16.msra.mxu0 %v777
    %978 = vmatprep.subr.bf16.mxu0 %v774
    %979 = vmatpush1.bf16.msra.mxu0 %v773
    %980 = vmatprep.subr.bf16.mxu0 %v770
    %981 = vmatpush1.bf16.msra.mxu0 %v769
    %982 = vmatprep.subr.bf16.mxu0 %v766
    %983 = vmatpush1.bf16.msra.mxu0 %v765
    %984 = vmatprep.subr.bf16.mxu0 %v762
    %985 = vmatpush1.bf16.msra.mxu0 %v761
    %986 = vmatprep.subr.bf16.mxu0 %v758
    %987 = vmatpush1.bf16.msra.mxu0 %v757
    %988 = vmatprep.subr.bf16.mxu0 %v754
    %989 = vmatpush1.bf16.msra.mxu0 %v753
    %990 = vmatprep.subr.bf16.mxu0 0
    %991 = vmatpush2.bf16.msra.mxu0 0
    %992 = vmatprep.subr.bf16.mxu0 0
    %993 = vmatpush2.bf16.msra.mxu0 0
    %994 = vmatprep.subr.bf16.mxu0 0
    %995 = vmatpush2.bf16.msra.mxu0 0
    %996 = vmatprep.subr.bf16.mxu0 0
    %997 = vmatpush2.bf16.msra.mxu0 0
    %998 = vmatprep.subr.bf16.mxu0 0
    %999 = vmatpush2.bf16.msra.mxu0 0
    %1000 = vmatprep.subr.bf16.mxu0 0
    %1001 = vmatpush2.bf16.msra.mxu0 0
    %1002 = vmatprep.subr.bf16.mxu0 0
    %1003 = vmatpush2.bf16.msra.mxu0 0
    %1004 = vmatprep.subr.bf16.mxu0 0
    %1005 = vmatpush2.bf16.msra.mxu0 0
    %1006 = vmatprep.mubr.bf16.mxu0 0
    %1007 = vmatmul.mubr.bf16.gmra.mxu0 %v932
    %v1008 = vpop.f32.mrf.mxu0
    %v1009 = vadd.f32 0.0, %v1008
    %v1010 = vpop.f32.mrf.mxu0
    %v1011 = vadd.f32 0.0, %v1010
    %v1012 = vpop.f32.mrf.mxu0
    %v1013 = vpop.f32.mrf.mxu0
    %1014 = vdwg.mxu0
    %v1015 = vadd.f32 %v928, %v968
    %v1016 = vadd.f32 %v929, %v970
    %v1017 = vadd.f32 %v930, %v1009
    %v1018 = vadd.f32 %v931, %v1011
    %v1019 = vxor.u32 %v1015, 2147483648
    %v1020 = vmul.f32 %v1019, 1.442695
    %v1021 = vpow.pop %v1020
    %v1022 = vadd.f32 %v1021, 1.0
    %v1023 = vrcp.pop %v1022
    %v1024 = vmul.f32 1.0, %v1023
    %v1025 = vxor.u32 %v1016, 2147483648
    %v1026 = vmul.f32 %v1025, 1.442695
    %v1027 = vpow.pop %v1026
    %v1028 = vadd.f32 %v1027, 1.0
    %v1029 = vrcp.pop %v1028
    %v1030 = vmul.f32 1.0, %v1029
    %v1031 = vtanh.pop %v1017
    %v1032 = vxor.u32 %v1018, 2147483648
    %v1033 = vmul.f32 %v1032, 1.442695
    %v1034 = vpow.pop %v1033
    %v1035 = vadd.f32 %v1034, 1.0
    %v1036 = vrcp.pop %v1035
    %v1037 = vmul.f32 1.0, %v1036
    %v1038 = vmul.f32 %v922, %v1030
    %v1039 = vmul.f32 %v1024, %v1031
    %v1040 = vadd.f32 %v1038, %v1039
    %v1041 = vtanh.pop %v1040
    %v1042 = vmul.f32 %v1037, %v1041
    %s1043 = smul.u32 2, 4
    %s1044 = smul.addr %s1043, 8
    %s1045 = scalar_lea.vmem [#allocation2], %s1044
    %v1046 = vld [vmem:[%s1045] sm:$0xff]
    %v1047 = vld [vmem:[%s1045 + $0x8] sm:$0xff]
    %v1048 = vld [vmem:[%s1045 + $0x10] sm:$0xff]
    %v1049 = vld [vmem:[%s1045 + $0x18] sm:$0xff]
    %v1050 = vpack.c.bf16 %v1042, %v1042
    %1051 = vmatprep.subr.bf16.mxu0 %v780
    %1052 = vmatpush1.bf16.msra.mxu0 %v779
    %1053 = vmatprep.subr.bf16.mxu0 %v776
    %1054 = vmatpush1.bf16.msra.mxu0 %v775
    %1055 = vmatprep.subr.bf16.mxu0 %v772
    %1056 = vmatpush1.bf16.msra.mxu0 %v771
    %1057 = vmatprep.subr.bf16.mxu0 %v768
    %1058 = vmatpush1.bf16.msra.mxu0 %v767
    %1059 = vmatprep.subr.bf16.mxu0 %v764
    %1060 = vmatpush1.bf16.msra.mxu0 %v763
    %1061 = vmatprep.subr.bf16.mxu0 %v760
    %1062 = vmatpush1.bf16.msra.mxu0 %v759
    %1063 = vmatprep.subr.bf16.mxu0 %v756
    %1064 = vmatpush1.bf16.msra.mxu0 %v755
    %1065 = vmatprep.subr.bf16.mxu0 %v752
    %1066 = vmatpush1.bf16.msra.mxu0 %v751
    %1067 = vmatprep.subr.bf16.mxu0 0
    %1068 = vmatpush2.bf16.msra.mxu0 0
    %1069 = vmatprep.subr.bf16.mxu0 0
    %1070 = vmatpush2.bf16.msra.mxu0 0
    %1071 = vmatprep.subr.bf16.mxu0 0
    %1072 = vmatpush2.bf16.msra.mxu0 0
    %1073 = vmatprep.subr.bf16.mxu0 0
    %1074 = vmatpush2.bf16.msra.mxu0 0
    %1075 = vmatprep.subr.bf16.mxu0 0
    %1076 = vmatpush2.bf16.msra.mxu0 0
    %1077 = vmatprep.subr.bf16.mxu0 0
    %1078 = vmatpush2.bf16.msra.mxu0 0
    %1079 = vmatprep.subr.bf16.mxu0 0
    %1080 = vmatpush2.bf16.msra.mxu0 0
    %1081 = vmatprep.subr.bf16.mxu0 0
    %1082 = vmatpush2.bf16.msra.mxu0 0
    %1083 = vmatprep.mubr.bf16.mxu0 0
    %1084 = vmatmul.mubr.bf16.gmra.mxu0 %v1050
    %v1085 = vpop.f32.mrf.mxu0
    %v1086 = vadd.f32 0.0, %v1085
    %v1087 = vpop.f32.mrf.mxu0
    %v1088 = vadd.f32 0.0, %v1087
    %v1089 = vpop.f32.mrf.mxu0
    %v1090 = vpop.f32.mrf.mxu0
    %1091 = vdwg.mxu0
    %1092 = vmatprep.subr.bf16.mxu0 %v782
    %1093 = vmatpush1.bf16.msra.mxu0 %v781
    %1094 = vmatprep.subr.bf16.mxu0 %v778
    %1095 = vmatpush1.bf16.msra.mxu0 %v777
    %1096 = vmatprep.subr.bf16.mxu0 %v774
    %1097 = vmatpush1.bf16.msra.mxu0 %v773
    %1098 = vmatprep.subr.bf16.mxu0 %v770
    %1099 = vmatpush1.bf16.msra.mxu0 %v769
    %1100 = vmatprep.subr.bf16.mxu0 %v766
    %1101 = vmatpush1.bf16.msra.mxu0 %v765
    %1102 = vmatprep.subr.bf16.mxu0 %v762
    %1103 = vmatpush1.bf16.msra.mxu0 %v761
    %1104 = vmatprep.subr.bf16.mxu0 %v758
    %1105 = vmatpush1.bf16.msra.mxu0 %v757
    %1106 = vmatprep.subr.bf16.mxu0 %v754
    %1107 = vmatpush1.bf16.msra.mxu0 %v753
    %1108 = vmatprep.subr.bf16.mxu0 0
    %1109 = vmatpush2.bf16.msra.mxu0 0
    %1110 = vmatprep.subr.bf16.mxu0 0
    %1111 = vmatpush2.bf16.msra.mxu0 0
    %1112 = vmatprep.subr.bf16.mxu0 0
    %1113 = vmatpush2.bf16.msra.mxu0 0
    %1114 = vmatprep.subr.bf16.mxu0 0
    %1115 = vmatpush2.bf16.msra.mxu0 0
    %1116 = vmatprep.subr.bf16.mxu0 0
    %1117 = vmatpush2.bf16.msra.mxu0 0
    %1118 = vmatprep.subr.bf16.mxu0 0
    %1119 = vmatpush2.bf16.msra.mxu0 0
    %1120 = vmatprep.subr.bf16.mxu0 0
    %1121 = vmatpush2.bf16.msra.mxu0 0
    %1122 = vmatprep.subr.bf16.mxu0 0
    %1123 = vmatpush2.bf16.msra.mxu0 0
    %1124 = vmatprep.mubr.bf16.mxu0 0
    %1125 = vmatmul.mubr.bf16.gmra.mxu0 %v1050
    %v1126 = vpop.f32.mrf.mxu0
    %v1127 = vadd.f32 0.0, %v1126
    %v1128 = vpop.f32.mrf.mxu0
    %v1129 = vadd.f32 0.0, %v1128
    %v1130 = vpop.f32.mrf.mxu0
    %v1131 = vpop.f32.mrf.mxu0
    %1132 = vdwg.mxu0
    %v1133 = vadd.f32 %v1046, %v1086
    %v1134 = vadd.f32 %v1047, %v1088
    %v1135 = vadd.f32 %v1048, %v1127
    %v1136 = vadd.f32 %v1049, %v1129
    %v1137 = vxor.u32 %v1133, 2147483648
    %v1138 = vmul.f32 %v1137, 1.442695
    %v1139 = vpow.pop %v1138
    %v1140 = vadd.f32 %v1139, 1.0
    %v1141 = vrcp.pop %v1140
    %v1142 = vmul.f32 1.0, %v1141
    %v1143 = vxor.u32 %v1134, 2147483648
    %v1144 = vmul.f32 %v1143, 1.442695
    %v1145 = vpow.pop %v1144
    %v1146 = vadd.f32 %v1145, 1.0
    %v1147 = vrcp.pop %v1146
    %v1148 = vmul.f32 1.0, %v1147
    %v1149 = vtanh.pop %v1135
    %v1150 = vxor.u32 %v1136, 2147483648
    %v1151 = vmul.f32 %v1150, 1.442695
    %v1152 = vpow.pop %v1151
    %v1153 = vadd.f32 %v1152, 1.0
    %v1154 = vrcp.pop %v1153
    %v1155 = vmul.f32 1.0, %v1154
    %v1156 = vmul.f32 %v1040, %v1148
    %v1157 = vmul.f32 %v1142, %v1149
    %v1158 = vadd.f32 %v1156, %v1157
    %v1159 = vtanh.pop %v1158
    %v1160 = vmul.f32 %v1155, %v1159
    %s1161 = smul.u32 3, 4
    %s1162 = smul.addr %s1161, 8
    %s1163 = scalar_lea.vmem [#allocation2], %s1162
    %v1164 = vld [vmem:[%s1163] sm:$0xff]
    %v1165 = vld [vmem:[%s1163 + $0x8] sm:$0xff]
    %v1166 = vld [vmem:[%s1163 + $0x10] sm:$0xff]
    %v1167 = vld [vmem:[%s1163 + $0x18] sm:$0xff]
    %v1168 = vpack.c.bf16 %v1160, %v1160
    %1169 = vmatprep.subr.bf16.mxu0 %v780
    %1170 = vmatpush1.bf16.msra.mxu0 %v779
    %1171 = vmatprep.subr.bf16.mxu0 %v776
    %1172 = vmatpush1.bf16.msra.mxu0 %v775
    %1173 = vmatprep.subr.bf16.mxu0 %v772
    %1174 = vmatpush1.bf16.msra.mxu0 %v771
    %1175 = vmatprep.subr.bf16.mxu0 %v768
    %1176 = vmatpush1.bf16.msra.mxu0 %v767
    %1177 = vmatprep.subr.bf16.mxu0 %v764
    %1178 = vmatpush1.bf16.msra.mxu0 %v763
    %1179 = vmatprep.subr.bf16.mxu0 %v760
    %1180 = vmatpush1.bf16.msra.mxu0 %v759
    %1181 = vmatprep.subr.bf16.mxu0 %v756
    %1182 = vmatpush1.bf16.msra.mxu0 %v755
    %1183 = vmatprep.subr.bf16.mxu0 %v752
    %1184 = vmatpush1.bf16.msra.mxu0 %v751
    %1185 = vmatprep.subr.bf16.mxu0 0
    %1186 = vmatpush2.bf16.msra.mxu0 0
    %1187 = vmatprep.subr.bf16.mxu0 0
    %1188 = vmatpush2.bf16.msra.mxu0 0
    %1189 = vmatprep.subr.bf16.mxu0 0
    %1190 = vmatpush2.bf16.msra.mxu0 0
    %1191 = vmatprep.subr.bf16.mxu0 0
    %1192 = vmatpush2.bf16.msra.mxu0 0
    %1193 = vmatprep.subr.bf16.mxu0 0
    %1194 = vmatpush2.bf16.msra.mxu0 0
    %1195 = vmatprep.subr.bf16.mxu0 0
    %1196 = vmatpush2.bf16.msra.mxu0 0
    %1197 = vmatprep.subr.bf16.mxu0 0
    %1198 = vmatpush2.bf16.msra.mxu0 0
    %1199 = vmatprep.subr.bf16.mxu0 0
    %1200 = vmatpush2.bf16.msra.mxu0 0
    %1201 = vmatprep.mubr.bf16.mxu0 0
    %1202 = vmatmul.mubr.bf16.gmra.mxu0 %v1168
    %v1203 = vpop.f32.mrf.mxu0
    %v1204 = vadd.f32 0.0, %v1203
    %v1205 = vpop.f32.mrf.mxu0
    %v1206 = vadd.f32 0.0, %v1205
    %v1207 = vpop.f32.mrf.mxu0
    %v1208 = vpop.f32.mrf.mxu0
    %1209 = vdwg.mxu0
    %1210 = vmatprep.subr.bf16.mxu0 %v782
    %1211 = vmatpush1.bf16.msra.mxu0 %v781
    %1212 = vmatprep.subr.bf16.mxu0 %v778
    %1213 = vmatpush1.bf16.msra.mxu0 %v777
    %1214 = vmatprep.subr.bf16.mxu0 %v774
    %1215 = vmatpush1.bf16.msra.mxu0 %v773
    %1216 = vmatprep.subr.bf16.mxu0 %v770
    %1217 = vmatpush1.bf16.msra.mxu0 %v769
    %1218 = vmatprep.subr.bf16.mxu0 %v766
    %1219 = vmatpush1.bf16.msra.mxu0 %v765
    %1220 = vmatprep.subr.bf16.mxu0 %v762
    %1221 = vmatpush1.bf16.msra.mxu0 %v761
    %1222 = vmatprep.subr.bf16.mxu0 %v758
    %1223 = vmatpush1.bf16.msra.mxu0 %v757
    %1224 = vmatprep.subr.bf16.mxu0 %v754
    %1225 = vmatpush1.bf16.msra.mxu0 %v753
    %1226 = vmatprep.subr.bf16.mxu0 0
    %1227 = vmatpush2.bf16.msra.mxu0 0
    %1228 = vmatprep.subr.bf16.mxu0 0
    %1229 = vmatpush2.bf16.msra.mxu0 0
    %1230 = vmatprep.subr.bf16.mxu0 0
    %1231 = vmatpush2.bf16.msra.mxu0 0
    %1232 = vmatprep.subr.bf16.mxu0 0
    %1233 = vmatpush2.bf16.msra.mxu0 0
    %1234 = vmatprep.subr.bf16.mxu0 0
    %1235 = vmatpush2.bf16.msra.mxu0 0
    %1236 = vmatprep.subr.bf16.mxu0 0
    %1237 = vmatpush2.bf16.msra.mxu0 0
    %1238 = vmatprep.subr.bf16.mxu0 0
    %1239 = vmatpush2.bf16.msra.mxu0 0
    %1240 = vmatprep.subr.bf16.mxu0 0
    %1241 = vmatpush2.bf16.msra.mxu0 0
    %1242 = vmatprep.mubr.bf16.mxu0 0
    %1243 = vmatmul.mubr.bf16.gmra.mxu0 %v1168
    %v1244 = vpop.f32.mrf.mxu0
    %v1245 = vadd.f32 0.0, %v1244
    %v1246 = vpop.f32.mrf.mxu0
    %v1247 = vadd.f32 0.0, %v1246
    %v1248 = vpop.f32.mrf.mxu0
    %v1249 = vpop.f32.mrf.mxu0
    %1250 = vdwg.mxu0
    %v1251 = vadd.f32 %v1164, %v1204
    %v1252 = vadd.f32 %v1165, %v1206
    %v1253 = vadd.f32 %v1166, %v1245
    %v1254 = vadd.f32 %v1167, %v1247
    %v1255 = vxor.u32 %v1251, 2147483648
    %v1256 = vmul.f32 %v1255, 1.442695
    %v1257 = vpow.pop %v1256
    %v1258 = vadd.f32 %v1257, 1.0
    %v1259 = vrcp.pop %v1258
    %v1260 = vmul.f32 1.0, %v1259
    %v1261 = vxor.u32 %v1252, 2147483648
    %v1262 = vmul.f32 %v1261, 1.442695
    %v1263 = vpow.pop %v1262
    %v1264 = vadd.f32 %v1263, 1.0
    %v1265 = vrcp.pop %v1264
    %v1266 = vmul.f32 1.0, %v1265
    %v1267 = vtanh.pop %v1253
    %v1268 = vxor.u32 %v1254, 2147483648
    %v1269 = vmul.f32 %v1268, 1.442695
    %v1270 = vpow.pop %v1269
    %v1271 = vadd.f32 %v1270, 1.0
    %v1272 = vrcp.pop %v1271
    %v1273 = vmul.f32 1.0, %v1272
    %v1274 = vmul.f32 %v1158, %v1266
    %v1275 = vmul.f32 %v1260, %v1267
    %v1276 = vadd.f32 %v1274, %v1275
    %v1277 = vtanh.pop %v1276
    %v1278 = vmul.f32 %v1273, %v1277
    %s1279 = smul.u32 4, 4
    %s1280 = smul.addr %s1279, 8
    %s1281 = scalar_lea.vmem [#allocation2], %s1280
    %v1282 = vld [vmem:[%s1281] sm:$0xff]
    %v1283 = vld [vmem:[%s1281 + $0x8] sm:$0xff]
    %v1284 = vld [vmem:[%s1281 + $0x10] sm:$0xff]
    %v1285 = vld [vmem:[%s1281 + $0x18] sm:$0xff]
    %v1286 = vpack.c.bf16 %v1278, %v1278
    %1287 = vmatprep.subr.bf16.mxu0 %v780
    %1288 = vmatpush1.bf16.msra.mxu0 %v779
    %1289 = vmatprep.subr.bf16.mxu0 %v776
    %1290 = vmatpush1.bf16.msra.mxu0 %v775
    %1291 = vmatprep.subr.bf16.mxu0 %v772
    %1292 = vmatpush1.bf16.msra.mxu0 %v771
    %1293 = vmatprep.subr.bf16.mxu0 %v768
    %1294 = vmatpush1.bf16.msra.mxu0 %v767
    %1295 = vmatprep.subr.bf16.mxu0 %v764
    %1296 = vmatpush1.bf16.msra.mxu0 %v763
    %1297 = vmatprep.subr.bf16.mxu0 %v760
    %1298 = vmatpush1.bf16.msra.mxu0 %v759
    %1299 = vmatprep.subr.bf16.mxu0 %v756
    %1300 = vmatpush1.bf16.msra.mxu0 %v755
    %1301 = vmatprep.subr.bf16.mxu0 %v752
    %1302 = vmatpush1.bf16.msra.mxu0 %v751
    %1303 = vmatprep.subr.bf16.mxu0 0
    %1304 = vmatpush2.bf16.msra.mxu0 0
    %1305 = vmatprep.subr.bf16.mxu0 0
    %1306 = vmatpush2.bf16.msra.mxu0 0
    %1307 = vmatprep.subr.bf16.mxu0 0
    %1308 = vmatpush2.bf16.msra.mxu0 0
    %1309 = vmatprep.subr.bf16.mxu0 0
    %1310 = vmatpush2.bf16.msra.mxu0 0
    %1311 = vmatprep.subr.bf16.mxu0 0
    %1312 = vmatpush2.bf16.msra.mxu0 0
    %1313 = vmatprep.subr.bf16.mxu0 0
    %1314 = vmatpush2.bf16.msra.mxu0 0
    %1315 = vmatprep.subr.bf16.mxu0 0
    %1316 = vmatpush2.bf16.msra.mxu0 0
    %1317 = vmatprep.subr.bf16.mxu0 0
    %1318 = vmatpush2.bf16.msra.mxu0 0
    %1319 = vmatprep.mubr.bf16.mxu0 0
    %1320 = vmatmul.mubr.bf16.gmra.mxu0 %v1286
    %v1321 = vpop.f32.mrf.mxu0
    %v1322 = vadd.f32 0.0, %v1321
    %v1323 = vpop.f32.mrf.mxu0
    %v1324 = vadd.f32 0.0, %v1323
    %v1325 = vpop.f32.mrf.mxu0
    %v1326 = vpop.f32.mrf.mxu0
    %1327 = vdwg.mxu0
    %1328 = vmatprep.subr.bf16.mxu0 %v782
    %1329 = vmatpush1.bf16.msra.mxu0 %v781
    %1330 = vmatprep.subr.bf16.mxu0 %v778
    %1331 = vmatpush1.bf16.msra.mxu0 %v777
    %1332 = vmatprep.subr.bf16.mxu0 %v774
    %1333 = vmatpush1.bf16.msra.mxu0 %v773
    %1334 = vmatprep.subr.bf16.mxu0 %v770
    %1335 = vmatpush1.bf16.msra.mxu0 %v769
    %1336 = vmatprep.subr.bf16.mxu0 %v766
    %1337 = vmatpush1.bf16.msra.mxu0 %v765
    %1338 = vmatprep.subr.bf16.mxu0 %v762
    %1339 = vmatpush1.bf16.msra.mxu0 %v761
    %1340 = vmatprep.subr.bf16.mxu0 %v758
    %1341 = vmatpush1.bf16.msra.mxu0 %v757
    %1342 = vmatprep.subr.bf16.mxu0 %v754
    %1343 = vmatpush1.bf16.msra.mxu0 %v753
    %1344 = vmatprep.subr.bf16.mxu0 0
    %1345 = vmatpush2.bf16.msra.mxu0 0
    %1346 = vmatprep.subr.bf16.mxu0 0
    %1347 = vmatpush2.bf16.msra.mxu0 0
    %1348 = vmatprep.subr.bf16.mxu0 0
    %1349 = vmatpush2.bf16.msra.mxu0 0
    %1350 = vmatprep.subr.bf16.mxu0 0
    %1351 = vmatpush2.bf16.msra.mxu0 0
    %1352 = vmatprep.subr.bf16.mxu0 0
    %1353 = vmatpush2.bf16.msra.mxu0 0
    %1354 = vmatprep.subr.bf16.mxu0 0
    %1355 = vmatpush2.bf16.msra.mxu0 0
    %1356 = vmatprep.subr.bf16.mxu0 0
    %1357 = vmatpush2.bf16.msra.mxu0 0
    %1358 = vmatprep.subr.bf16.mxu0 0
    %1359 = vmatpush2.bf16.msra.mxu0 0
    %1360 = vmatprep.mubr.bf16.mxu0 0
    %1361 = vmatmul.mubr.bf16.gmra.mxu0 %v1286
    %v1362 = vpop.f32.mrf.mxu0
    %v1363 = vadd.f32 0.0, %v1362
    %v1364 = vpop.f32.mrf.mxu0
    %v1365 = vadd.f32 0.0, %v1364
    %v1366 = vpop.f32.mrf.mxu0
    %v1367 = vpop.f32.mrf.mxu0
    %1368 = vdwg.mxu0
    %v1369 = vadd.f32 %v1282, %v1322
    %v1370 = vadd.f32 %v1283, %v1324
    %v1371 = vadd.f32 %v1284, %v1363
    %v1372 = vadd.f32 %v1285, %v1365
    %v1373 = vxor.u32 %v1369, 2147483648
    %v1374 = vmul.f32 %v1373, 1.442695
    %v1375 = vpow.pop %v1374
    %v1376 = vadd.f32 %v1375, 1.0
    %v1377 = vrcp.pop %v1376
    %v1378 = vmul.f32 1.0, %v1377
    %v1379 = vxor.u32 %v1370, 2147483648
    %v1380 = vmul.f32 %v1379, 1.442695
    %v1381 = vpow.pop %v1380
    %v1382 = vadd.f32 %v1381, 1.0
    %v1383 = vrcp.pop %v1382
    %v1384 = vmul.f32 1.0, %v1383
    %v1385 = vtanh.pop %v1371
    %v1386 = vxor.u32 %v1372, 2147483648
    %v1387 = vmul.f32 %v1386, 1.442695
    %v1388 = vpow.pop %v1387
    %v1389 = vadd.f32 %v1388, 1.0
    %v1390 = vrcp.pop %v1389
    %v1391 = vmul.f32 1.0, %v1390
    %v1392 = vmul.f32 %v1276, %v1384
    %v1393 = vmul.f32 %v1378, %v1385
    %v1394 = vadd.f32 %v1392, %v1393
    %v1395 = vtanh.pop %v1394
    %v1396 = vmul.f32 %v1391, %v1395
    %s1397 = smul.u32 5, 4
    %s1398 = smul.addr %s1397, 8
    %s1399 = scalar_lea.vmem [#allocation2], %s1398
    %v1400 = vld [vmem:[%s1399] sm:$0xff]
    %v1401 = vld [vmem:[%s1399 + $0x8] sm:$0xff]
    %v1402 = vld [vmem:[%s1399 + $0x10] sm:$0xff]
    %v1403 = vld [vmem:[%s1399 + $0x18] sm:$0xff]
    %v1404 = vpack.c.bf16 %v1396, %v1396
    %1405 = vmatprep.subr.bf16.mxu0 %v780
    %1406 = vmatpush1.bf16.msra.mxu0 %v779
    %1407 = vmatprep.subr.bf16.mxu0 %v776
    %1408 = vmatpush1.bf16.msra.mxu0 %v775
    %1409 = vmatprep.subr.bf16.mxu0 %v772
    %1410 = vmatpush1.bf16.msra.mxu0 %v771
    %1411 = vmatprep.subr.bf16.mxu0 %v768
    %1412 = vmatpush1.bf16.msra.mxu0 %v767
    %1413 = vmatprep.subr.bf16.mxu0 %v764
    %1414 = vmatpush1.bf16.msra.mxu0 %v763
    %1415 = vmatprep.subr.bf16.mxu0 %v760
    %1416 = vmatpush1.bf16.msra.mxu0 %v759
    %1417 = vmatprep.subr.bf16.mxu0 %v756
    %1418 = vmatpush1.bf16.msra.mxu0 %v755
    %1419 = vmatprep.subr.bf16.mxu0 %v752
    %1420 = vmatpush1.bf16.msra.mxu0 %v751
    %1421 = vmatprep.subr.bf16.mxu0 0
    %1422 = vmatpush2.bf16.msra.mxu0 0
    %1423 = vmatprep.subr.bf16.mxu0 0
    %1424 = vmatpush2.bf16.msra.mxu0 0
    %1425 = vmatprep.subr.bf16.mxu0 0
    %1426 = vmatpush2.bf16.msra.mxu0 0
    %1427 = vmatprep.subr.bf16.mxu0 0
    %1428 = vmatpush2.bf16.msra.mxu0 0
    %1429 = vmatprep.subr.bf16.mxu0 0
    %1430 = vmatpush2.bf16.msra.mxu0 0
    %1431 = vmatprep.subr.bf16.mxu0 0
    %1432 = vmatpush2.bf16.msra.mxu0 0
    %1433 = vmatprep.subr.bf16.mxu0 0
    %1434 = vmatpush2.bf16.msra.mxu0 0
    %1435 = vmatprep.subr.bf16.mxu0 0
    %1436 = vmatpush2.bf16.msra.mxu0 0
    %1437 = vmatprep.mubr.bf16.mxu0 0
    %1438 = vmatmul.mubr.bf16.gmra.mxu0 %v1404
    %v1439 = vpop.f32.mrf.mxu0
    %v1440 = vadd.f32 0.0, %v1439
    %v1441 = vpop.f32.mrf.mxu0
    %v1442 = vadd.f32 0.0, %v1441
    %v1443 = vpop.f32.mrf.mxu0
    %v1444 = vpop.f32.mrf.mxu0
    %1445 = vdwg.mxu0
    %1446 = vmatprep.subr.bf16.mxu0 %v782
    %1447 = vmatpush1.bf16.msra.mxu0 %v781
    %1448 = vmatprep.subr.bf16.mxu0 %v778
    %1449 = vmatpush1.bf16.msra.mxu0 %v777
    %1450 = vmatprep.subr.bf16.mxu0 %v774
    %1451 = vmatpush1.bf16.msra.mxu0 %v773
    %1452 = vmatprep.subr.bf16.mxu0 %v770
    %1453 = vmatpush1.bf16.msra.mxu0 %v769
    %1454 = vmatprep.subr.bf16.mxu0 %v766
    %1455 = vmatpush1.bf16.msra.mxu0 %v765
    %1456 = vmatprep.subr.bf16.mxu0 %v762
    %1457 = vmatpush1.bf16.msra.mxu0 %v761
    %1458 = vmatprep.subr.bf16.mxu0 %v758
    %1459 = vmatpush1.bf16.msra.mxu0 %v757
    %1460 = vmatprep.subr.bf16.mxu0 %v754
    %1461 = vmatpush1.bf16.msra.mxu0 %v753
    %1462 = vmatprep.subr.bf16.mxu0 0
    %1463 = vmatpush2.bf16.msra.mxu0 0
    %1464 = vmatprep.subr.bf16.mxu0 0
    %1465 = vmatpush2.bf16.msra.mxu0 0
    %1466 = vmatprep.subr.bf16.mxu0 0
    %1467 = vmatpush2.bf16.msra.mxu0 0
    %1468 = vmatprep.subr.bf16.mxu0 0
    %1469 = vmatpush2.bf16.msra.mxu0 0
    %1470 = vmatprep.subr.bf16.mxu0 0
    %1471 = vmatpush2.bf16.msra.mxu0 0
    %1472 = vmatprep.subr.bf16.mxu0 0
    %1473 = vmatpush2.bf16.msra.mxu0 0
    %1474 = vmatprep.subr.bf16.mxu0 0
    %1475 = vmatpush2.bf16.msra.mxu0 0
    %1476 = vmatprep.subr.bf16.mxu0 0
    %1477 = vmatpush2.bf16.msra.mxu0 0
    %1478 = vmatprep.mubr.bf16.mxu0 0
    %1479 = vmatmul.mubr.bf16.gmra.mxu0 %v1404
    %v1480 = vpop.f32.mrf.mxu0
    %v1481 = vadd.f32 0.0, %v1480
    %v1482 = vpop.f32.mrf.mxu0
    %v1483 = vadd.f32 0.0, %v1482
    %v1484 = vpop.f32.mrf.mxu0
    %v1485 = vpop.f32.mrf.mxu0
    %1486 = vdwg.mxu0
    %v1487 = vadd.f32 %v1400, %v1440
    %v1488 = vadd.f32 %v1401, %v1442
    %v1489 = vadd.f32 %v1402, %v1481
    %v1490 = vadd.f32 %v1403, %v1483
    %v1491 = vxor.u32 %v1487, 2147483648
    %v1492 = vmul.f32 %v1491, 1.442695
    %v1493 = vpow.pop %v1492
    %v1494 = vadd.f32 %v1493, 1.0
    %v1495 = vrcp.pop %v1494
    %v1496 = vmul.f32 1.0, %v1495
    %v1497 = vxor.u32 %v1488, 2147483648
    %v1498 = vmul.f32 %v1497, 1.442695
    %v1499 = vpow.pop %v1498
    %v1500 = vadd.f32 %v1499, 1.0
    %v1501 = vrcp.pop %v1500
    %v1502 = vmul.f32 1.0, %v1501
    %v1503 = vtanh.pop %v1489
    %v1504 = vxor.u32 %v1490, 2147483648
    %v1505 = vmul.f32 %v1504, 1.442695
    %v1506 = vpow.pop %v1505
    %v1507 = vadd.f32 %v1506, 1.0
    %v1508 = vrcp.pop %v1507
    %v1509 = vmul.f32 1.0, %v1508
    %v1510 = vmul.f32 %v1394, %v1502
    %v1511 = vmul.f32 %v1496, %v1503
    %v1512 = vadd.f32 %v1510, %v1511
    %v1513 = vtanh.pop %v1512
    %v1514 = vmul.f32 %v1509, %v1513
    %s1515 = smul.u32 6, 4
    %s1516 = smul.addr %s1515, 8
    %s1517 = scalar_lea.vmem [#allocation2], %s1516
    %v1518 = vld [vmem:[%s1517] sm:$0xff]
    %v1519 = vld [vmem:[%s1517 + $0x8] sm:$0xff]
    %v1520 = vld [vmem:[%s1517 + $0x10] sm:$0xff]
    %v1521 = vld [vmem:[%s1517 + $0x18] sm:$0xff]
    %v1522 = vpack.c.bf16 %v1514, %v1514
    %1523 = vmatprep.subr.bf16.mxu0 %v780
    %1524 = vmatpush1.bf16.msra.mxu0 %v779
    %1525 = vmatprep.subr.bf16.mxu0 %v776
    %1526 = vmatpush1.bf16.msra.mxu0 %v775
    %1527 = vmatprep.subr.bf16.mxu0 %v772
    %1528 = vmatpush1.bf16.msra.mxu0 %v771
    %1529 = vmatprep.subr.bf16.mxu0 %v768
    %1530 = vmatpush1.bf16.msra.mxu0 %v767
    %1531 = vmatprep.subr.bf16.mxu0 %v764
    %1532 = vmatpush1.bf16.msra.mxu0 %v763
    %1533 = vmatprep.subr.bf16.mxu0 %v760
    %1534 = vmatpush1.bf16.msra.mxu0 %v759
    %1535 = vmatprep.subr.bf16.mxu0 %v756
    %1536 = vmatpush1.bf16.msra.mxu0 %v755
    %1537 = vmatprep.subr.bf16.mxu0 %v752
    %1538 = vmatpush1.bf16.msra.mxu0 %v751
    %1539 = vmatprep.subr.bf16.mxu0 0
    %1540 = vmatpush2.bf16.msra.mxu0 0
    %1541 = vmatprep.subr.bf16.mxu0 0
    %1542 = vmatpush2.bf16.msra.mxu0 0
    %1543 = vmatprep.subr.bf16.mxu0 0
    %1544 = vmatpush2.bf16.msra.mxu0 0
    %1545 = vmatprep.subr.bf16.mxu0 0
    %1546 = vmatpush2.bf16.msra.mxu0 0
    %1547 = vmatprep.subr.bf16.mxu0 0
    %1548 = vmatpush2.bf16.msra.mxu0 0
    %1549 = vmatprep.subr.bf16.mxu0 0
    %1550 = vmatpush2.bf16.msra.mxu0 0
    %1551 = vmatprep.subr.bf16.mxu0 0
    %1552 = vmatpush2.bf16.msra.mxu0 0
    %1553 = vmatprep.subr.bf16.mxu0 0
    %1554 = vmatpush2.bf16.msra.mxu0 0
    %1555 = vmatprep.mubr.bf16.mxu0 0
    %1556 = vmatmul.mubr.bf16.gmra.mxu0 %v1522
    %v1557 = vpop.f32.mrf.mxu0
    %v1558 = vadd.f32 0.0, %v1557
    %v1559 = vpop.f32.mrf.mxu0
    %v1560 = vadd.f32 0.0, %v1559
    %v1561 = vpop.f32.mrf.mxu0
    %v1562 = vpop.f32.mrf.mxu0
    %1563 = vdwg.mxu0
    %1564 = vmatprep.subr.bf16.mxu0 %v782
    %1565 = vmatpush1.bf16.msra.mxu0 %v781
    %1566 = vmatprep.subr.bf16.mxu0 %v778
    %1567 = vmatpush1.bf16.msra.mxu0 %v777
    %1568 = vmatprep.subr.bf16.mxu0 %v774
    %1569 = vmatpush1.bf16.msra.mxu0 %v773
    %1570 = vmatprep.subr.bf16.mxu0 %v770
    %1571 = vmatpush1.bf16.msra.mxu0 %v769
    %1572 = vmatprep.subr.bf16.mxu0 %v766
    %1573 = vmatpush1.bf16.msra.mxu0 %v765
    %1574 = vmatprep.subr.bf16.mxu0 %v762
    %1575 = vmatpush1.bf16.msra.mxu0 %v761
    %1576 = vmatprep.subr.bf16.mxu0 %v758
    %1577 = vmatpush1.bf16.msra.mxu0 %v757
    %1578 = vmatprep.subr.bf16.mxu0 %v754
    %1579 = vmatpush1.bf16.msra.mxu0 %v753
    %1580 = vmatprep.subr.bf16.mxu0 0
    %1581 = vmatpush2.bf16.msra.mxu0 0
    %1582 = vmatprep.subr.bf16.mxu0 0
    %1583 = vmatpush2.bf16.msra.mxu0 0
    %1584 = vmatprep.subr.bf16.mxu0 0
    %1585 = vmatpush2.bf16.msra.mxu0 0
    %1586 = vmatprep.subr.bf16.mxu0 0
    %1587 = vmatpush2.bf16.msra.mxu0 0
    %1588 = vmatprep.subr.bf16.mxu0 0
    %1589 = vmatpush2.bf16.msra.mxu0 0
    %1590 = vmatprep.subr.bf16.mxu0 0
    %1591 = vmatpush2.bf16.msra.mxu0 0
    %1592 = vmatprep.subr.bf16.mxu0 0
    %1593 = vmatpush2.bf16.msra.mxu0 0
    %1594 = vmatprep.subr.bf16.mxu0 0
    %1595 = vmatpush2.bf16.msra.mxu0 0
    %1596 = vmatprep.mubr.bf16.mxu0 0
    %1597 = vmatmul.mubr.bf16.gmra.mxu0 %v1522
    %v1598 = vpop.f32.mrf.mxu0
    %v1599 = vadd.f32 0.0, %v1598
    %v1600 = vpop.f32.mrf.mxu0
    %v1601 = vadd.f32 0.0, %v1600
    %v1602 = vpop.f32.mrf.mxu0
    %v1603 = vpop.f32.mrf.mxu0
    %1604 = vdwg.mxu0
    %v1605 = vadd.f32 %v1518, %v1558
    %v1606 = vadd.f32 %v1519, %v1560
    %v1607 = vadd.f32 %v1520, %v1599
    %v1608 = vadd.f32 %v1521, %v1601
    %v1609 = vxor.u32 %v1605, 2147483648
    %v1610 = vmul.f32 %v1609, 1.442695
    %v1611 = vpow.pop %v1610
    %v1612 = vadd.f32 %v1611, 1.0
    %v1613 = vrcp.pop %v1612
    %v1614 = vmul.f32 1.0, %v1613
    %v1615 = vxor.u32 %v1606, 2147483648
    %v1616 = vmul.f32 %v1615, 1.442695
    %v1617 = vpow.pop %v1616
    %v1618 = vadd.f32 %v1617, 1.0
    %v1619 = vrcp.pop %v1618
    %v1620 = vmul.f32 1.0, %v1619
    %v1621 = vtanh.pop %v1607
    %v1622 = vxor.u32 %v1608, 2147483648
    %v1623 = vmul.f32 %v1622, 1.442695
    %v1624 = vpow.pop %v1623
    %v1625 = vadd.f32 %v1624, 1.0
    %v1626 = vrcp.pop %v1625
    %v1627 = vmul.f32 1.0, %v1626
    %v1628 = vmul.f32 %v1512, %v1620
    %v1629 = vmul.f32 %v1614, %v1621
    %v1630 = vadd.f32 %v1628, %v1629
    %v1631 = vtanh.pop %v1630
    %v1632 = vmul.f32 %v1627, %v1631
    %s1633 = smul.u32 7, 4
    %s1634 = smul.addr %s1633, 8
    %s1635 = scalar_lea.vmem [#allocation2], %s1634
    %v1636 = vld [vmem:[%s1635] sm:$0xff]
    %v1637 = vld [vmem:[%s1635 + $0x8] sm:$0xff]
    %v1638 = vld [vmem:[%s1635 + $0x10] sm:$0xff]
    %v1639 = vld [vmem:[%s1635 + $0x18] sm:$0xff]
    %v1640 = vpack.c.bf16 %v1632, %v1632
    %1641 = vmatprep.subr.bf16.mxu0 %v780
    %1642 = vmatpush1.bf16.msra.mxu0 %v779
    %1643 = vmatprep.subr.bf16.mxu0 %v776
    %1644 = vmatpush1.bf16.msra.mxu0 %v775
    %1645 = vmatprep.subr.bf16.mxu0 %v772
    %1646 = vmatpush1.bf16.msra.mxu0 %v771
    %1647 = vmatprep.subr.bf16.mxu0 %v768
    %1648 = vmatpush1.bf16.msra.mxu0 %v767
    %1649 = vmatprep.subr.bf16.mxu0 %v764
    %1650 = vmatpush1.bf16.msra.mxu0 %v763
    %1651 = vmatprep.subr.bf16.mxu0 %v760
    %1652 = vmatpush1.bf16.msra.mxu0 %v759
    %1653 = vmatprep.subr.bf16.mxu0 %v756
    %1654 = vmatpush1.bf16.msra.mxu0 %v755
    %1655 = vmatprep.subr.bf16.mxu0 %v752
    %1656 = vmatpush1.bf16.msra.mxu0 %v751
    %1657 = vmatprep.subr.bf16.mxu0 0
    %1658 = vmatpush2.bf16.msra.mxu0 0
    %1659 = vmatprep.subr.bf16.mxu0 0
    %1660 = vmatpush2.bf16.msra.mxu0 0
    %1661 = vmatprep.subr.bf16.mxu0 0
    %1662 = vmatpush2.bf16.msra.mxu0 0
    %1663 = vmatprep.subr.bf16.mxu0 0
    %1664 = vmatpush2.bf16.msra.mxu0 0
    %1665 = vmatprep.subr.bf16.mxu0 0
    %1666 = vmatpush2.bf16.msra.mxu0 0
    %1667 = vmatprep.subr.bf16.mxu0 0
    %1668 = vmatpush2.bf16.msra.mxu0 0
    %1669 = vmatprep.subr.bf16.mxu0 0
    %1670 = vmatpush2.bf16.msra.mxu0 0
    %1671 = vmatprep.subr.bf16.mxu0 0
    %1672 = vmatpush2.bf16.msra.mxu0 0
    %1673 = vmatprep.mubr.bf16.mxu0 0
    %1674 = vmatmul.mubr.bf16.gmra.mxu0 %v1640
    %v1675 = vpop.f32.mrf.mxu0
    %v1676 = vadd.f32 0.0, %v1675
    %v1677 = vpop.f32.mrf.mxu0
    %v1678 = vadd.f32 0.0, %v1677
    %v1679 = vpop.f32.mrf.mxu0
    %v1680 = vpop.f32.mrf.mxu0
    %1681 = vdwg.mxu0
    %1682 = vmatprep.subr.bf16.mxu0 %v782
    %1683 = vmatpush1.bf16.msra.mxu0 %v781
    %1684 = vmatprep.subr.bf16.mxu0 %v778
    %1685 = vmatpush1.bf16.msra.mxu0 %v777
    %1686 = vmatprep.subr.bf16.mxu0 %v774
    %1687 = vmatpush1.bf16.msra.mxu0 %v773
    %1688 = vmatprep.subr.bf16.mxu0 %v770
    %1689 = vmatpush1.bf16.msra.mxu0 %v769
    %1690 = vmatprep.subr.bf16.mxu0 %v766
    %1691 = vmatpush1.bf16.msra.mxu0 %v765
    %1692 = vmatprep.subr.bf16.mxu0 %v762
    %1693 = vmatpush1.bf16.msra.mxu0 %v761
    %1694 = vmatprep.subr.bf16.mxu0 %v758
    %1695 = vmatpush1.bf16.msra.mxu0 %v757
    %1696 = vmatprep.subr.bf16.mxu0 %v754
    %1697 = vmatpush1.bf16.msra.mxu0 %v753
    %1698 = vmatprep.subr.bf16.mxu0 0
    %1699 = vmatpush2.bf16.msra.mxu0 0
    %1700 = vmatprep.subr.bf16.mxu0 0
    %1701 = vmatpush2.bf16.msra.mxu0 0
    %1702 = vmatprep.subr.bf16.mxu0 0
    %1703 = vmatpush2.bf16.msra.mxu0 0
    %1704 = vmatprep.subr.bf16.mxu0 0
    %1705 = vmatpush2.bf16.msra.mxu0 0
    %1706 = vmatprep.subr.bf16.mxu0 0
    %1707 = vmatpush2.bf16.msra.mxu0 0
    %1708 = vmatprep.subr.bf16.mxu0 0
    %1709 = vmatpush2.bf16.msra.mxu0 0
    %1710 = vmatprep.subr.bf16.mxu0 0
    %1711 = vmatpush2.bf16.msra.mxu0 0
    %1712 = vmatprep.subr.bf16.mxu0 0
    %1713 = vmatpush2.bf16.msra.mxu0 0
    %1714 = vmatprep.mubr.bf16.mxu0 0
    %1715 = vmatmul.mubr.bf16.gmra.mxu0 %v1640
    %v1716 = vpop.f32.mrf.mxu0
    %v1717 = vadd.f32 0.0, %v1716
    %v1718 = vpop.f32.mrf.mxu0
    %v1719 = vadd.f32 0.0, %v1718
    %v1720 = vpop.f32.mrf.mxu0
    %v1721 = vpop.f32.mrf.mxu0
    %1722 = vdwg.mxu0
    %v1723 = vadd.f32 %v1636, %v1676
    %v1724 = vadd.f32 %v1637, %v1678
    %v1725 = vadd.f32 %v1638, %v1717
    %v1726 = vadd.f32 %v1639, %v1719
    %v1727 = vxor.u32 %v1723, 2147483648
    %v1728 = vmul.f32 %v1727, 1.442695
    %v1729 = vpow.pop %v1728
    %v1730 = vadd.f32 %v1729, 1.0
    %v1731 = vrcp.pop %v1730
    %v1732 = vmul.f32 1.0, %v1731
    %v1733 = vxor.u32 %v1724, 2147483648
    %v1734 = vmul.f32 %v1733, 1.442695
    %v1735 = vpow.pop %v1734
    %v1736 = vadd.f32 %v1735, 1.0
    %v1737 = vrcp.pop %v1736
    %v1738 = vmul.f32 1.0, %v1737
    %v1739 = vtanh.pop %v1725
    %v1740 = vxor.u32 %v1726, 2147483648
    %v1741 = vmul.f32 %v1740, 1.442695
    %v1742 = vpow.pop %v1741
    %v1743 = vadd.f32 %v1742, 1.0
    %v1744 = vrcp.pop %v1743
    %v1745 = vmul.f32 1.0, %v1744
    %v1746 = vmul.f32 %v1630, %v1738
    %v1747 = vmul.f32 %v1732, %v1739
    %v1748 = vadd.f32 %v1746, %v1747
    %v1749 = vtanh.pop %v1748
    %v1750 = vmul.f32 %v1745, %v1749
    %s1751 = smul.u32 4, 16
    %s1752 = smul.u32 %s1751, 1
    %s1753 = sshll.u32 %s1752, 4
    %1754 = dma.done [#allocation5], %s1753
    %s1755 = smul.u32 1, 1
    %s1756 = sshll.u32 %s1755, 4
    %1757 = dma.done %s280, %s1756
    %v1758 = vpack.c.bf16 %v1750, %v1750
    %v1759 = vld [vmem:[#allocation3] sm:$0xf]
    %v1760 = vld [vmem:[#allocation3 + $0x4] sm:$0xf]
    %v1761 = vld [vmem:[#allocation3 + $0x8] sm:$0xf]
    %v1762 = vld [vmem:[#allocation3 + $0xc] sm:$0xf]
    %v1763 = vld [vmem:[#allocation3 + $0x10] sm:$0xf]
    %v1764 = vld [vmem:[#allocation3 + $0x14] sm:$0xf]
    %v1765 = vld [vmem:[#allocation3 + $0x18] sm:$0xf]
    %v1766 = vld [vmem:[#allocation3 + $0x1c] sm:$0xf]
    %v1767 = vld [vmem:[#allocation3 + $0x20] sm:$0xf]
    %v1768 = vld [vmem:[#allocation3 + $0x24] sm:$0xf]
    %v1769 = vld [vmem:[#allocation3 + $0x28] sm:$0xf]
    %v1770 = vld [vmem:[#allocation3 + $0x2c] sm:$0xf]
    %v1771 = vld [vmem:[#allocation3 + $0x30] sm:$0xf]
    %v1772 = vld [vmem:[#allocation3 + $0x34] sm:$0xf]
    %v1773 = vld [vmem:[#allocation3 + $0x38] sm:$0xf]
    %v1774 = vld [vmem:[#allocation3 + $0x3c] sm:$0xf]
    %v1775 = vld [vmem:[#allocation4] sm:$0x1]
    %v1777 = vlaneseq
    %v1778 = vshrl.u32 %v1777, 7
    %v1779 = vsub.s32 0, %v1778
    %v1780 = vrot.slane %v1775, %v1779
    %v1798 = vunpack.c.l.b16 %v1759
    %v1799 = vunpack.c.l.b16 %v1760
    %v1800 = vunpack.c.l.b16 %v1761
    %v1801 = vunpack.c.l.b16 %v1762
    %v1802 = vunpack.c.l.b16 %v1763
    %v1803 = vunpack.c.l.b16 %v1764
    %v1804 = vunpack.c.l.b16 %v1765
    %v1805 = vunpack.c.l.b16 %v1766
    %v1806 = vunpack.c.l.b16 %v1767
    %v1807 = vunpack.c.l.b16 %v1768
    %v1808 = vunpack.c.l.b16 %v1769
    %v1809 = vunpack.c.l.b16 %v1770
    %v1810 = vunpack.c.l.b16 %v1771
    %v1811 = vunpack.c.l.b16 %v1772
    %v1812 = vunpack.c.l.b16 %v1773
    %v1813 = vunpack.c.l.b16 %v1774
    %v1814 = vpack.c.b16 %v1799, %v1798
    %v1815 = vpack.c.b16 %v1801, %v1800
    %v1816 = vpack.c.b16 %v1803, %v1802
    %v1817 = vpack.c.b16 %v1805, %v1804
    %v1818 = vpack.c.b16 %v1807, %v1806
    %v1819 = vpack.c.b16 %v1809, %v1808
    %v1820 = vpack.c.b16 %v1811, %v1810
    %v1821 = vpack.c.b16 %v1813, %v1812
    %1830 = vmatprep.subr.bf16.mxu0 0
    %1831 = vmatpush1.bf16.msra.mxu0 %v1821
    %1832 = vmatprep.subr.bf16.mxu0 0
    %1833 = vmatpush1.bf16.msra.mxu0 %v1820
    %1834 = vmatprep.subr.bf16.mxu0 0
    %1835 = vmatpush1.bf16.msra.mxu0 %v1819
    %1836 = vmatprep.subr.bf16.mxu0 0
    %1837 = vmatpush1.bf16.msra.mxu0 %v1818
    %1838 = vmatprep.subr.bf16.mxu0 0
    %1839 = vmatpush1.bf16.msra.mxu0 %v1817
    %1840 = vmatprep.subr.bf16.mxu0 0
    %1841 = vmatpush1.bf16.msra.mxu0 %v1816
    %1842 = vmatprep.subr.bf16.mxu0 0
    %1843 = vmatpush1.bf16.msra.mxu0 %v1815
    %1844 = vmatprep.subr.bf16.mxu0 0
    %1845 = vmatpush1.bf16.msra.mxu0 %v1814
    %1846 = vmatprep.subr.bf16.mxu0 0
    %1847 = vmatpush2.bf16.msra.mxu0 0
    %1848 = vmatprep.subr.bf16.mxu0 0
    %1849 = vmatpush2.bf16.msra.mxu0 0
    %1850 = vmatprep.subr.bf16.mxu0 0
    %1851 = vmatpush2.bf16.msra.mxu0 0
    %1852 = vmatprep.subr.bf16.mxu0 0
    %1853 = vmatpush2.bf16.msra.mxu0 0
    %1854 = vmatprep.subr.bf16.mxu0 0
    %1855 = vmatpush2.bf16.msra.mxu0 0
    %1856 = vmatprep.subr.bf16.mxu0 0
    %1857 = vmatpush2.bf16.msra.mxu0 0
    %1858 = vmatprep.subr.bf16.mxu0 0
    %1859 = vmatpush2.bf16.msra.mxu0 0
    %1860 = vmatprep.subr.bf16.mxu0 0
    %1861 = vmatpush2.bf16.msra.mxu0 0
    %1862 = vmatprep.mubr.bf16.mxu0 0
    %1863 = vmatmul.mubr.bf16.gmra.mxu0 %v1758
    %v1864 = vpop.f32.mrf.mxu0
    %v1865 = vadd.f32 %v1780, %v1864
    %v1866 = vpop.f32.mrf.mxu0
    %v1867 = vpop.f32.mrf.mxu0
    %v1868 = vpop.f32.mrf.mxu0
    %1869 = vdwg.mxu0
    %1870 = vst [vmem:[#allocation14] sm:$0xff] %v1865
    // Predicated region
    $region86: #{lstm_model_forward.2} parent=1 // pred_check
      _
    $region87: #{lstm_model_forward.2} parent=1 // pred_check_branch
      %1872 = sbr.rel (0) target = $region89
    $region88: #{lstm_model_forward.2} parent=1 // pred_region
      %s1874 = ssub.s32 128, 128
      %1875 = vsyncadd [#allocation13], %s1874
      %s1877 = sshll.u32 [#allocation14], 4
      %s1878 = int_to_ptr.vmem [resolvable:$true] %s1877
      %1880 = dma.vmem_to_hbm [thread:$0]  %s1878, 128, %s7, [#allocation13]
    $region89: #{lstm_model_forward.2} parent=1 // pred_fallthru
      _
    // Predicated region
    $region90: #{lstm_model_forward.2} parent=1 // pred_check
      _
    $region91: #{lstm_model_forward.2} parent=1 // pred_check_branch
      %1882 = sbr.rel (0) target = $region93
    $region92: #{lstm_model_forward.2} parent=1 // pred_region
      %1883 = dma.done [#allocation13], 128
    $region93: #{lstm_model_forward.2} parent=1 // pred_fallthru
      _
    %1884 = vsyncpa [#allocation12], 1
    %1885 = vsyncpa [#allocation13], 1
  %1886 = vsyncmov [#allocation5]
  %s1887 = vpop.sfrf %1886
  %p1888 = scmp.eq.s32.totalorder %s1887, 0
  %p1889 = pneg %p1888
  %1891 = shalt.err (%p1889)
  %s1892 = scalar_lea.sflag [#allocation5], 1
  %1893 = vsyncmov %s1892
  %s1894 = vpop.sfrf %1893
  %p1895 = scmp.eq.s32.totalorder %s1894, 0
  %p1896 = pneg %p1895
  %1898 = shalt.err (%p1896)

</llo_original>
